<compile_context>
chip_gen: v7x
topology: tpu7x:2x2x1
jax: 0.10.0
libtpu: 0.0.40
codegen_flags: <defaults>
</compile_context>

<pallas_src>
import math
from functools import partial

import jax
import jax.numpy as jnp
from jax import lax
from jax.experimental import pallas as pl
from jax.experimental.pallas import tpu as pltpu


# ------------------------------ fused kernel ------------------------------- #

def _mla_kernel(x_ref, wproj_ref, bproj_ref, wout_ref, bout_ref, o_ref,
                *, B, T, num_heads, head_dim, latent_head_dim):
    E = num_heads * head_dim
    L = num_heads * latent_head_dim

    x = x_ref[...]                                                   # (B*T, E) f32

    # Single fused projection: q (pre-scaled), k_lat, v_lat in one MXU matmul.
    proj = jnp.dot(x, wproj_ref[...], preferred_element_type=jnp.float32)
    proj = proj + bproj_ref[...]                                     # (B*T, E+2L)

    bout = bout_ref[...]                                             # (1, E)
    nt_dims = (((1,), (1,)), ((), ()))     # contract last dims: q @ k^T w/o transpose

    for b in range(B):                     # B is tiny & static -> unrolled
        r = b * T
        qb = proj[r:r + T, 0:E]                                      # (T, E)  (already * 1/sqrt(Dh))
        kb = proj[r:r + T, E:E + L]                                  # (T, L)
        vb = proj[r:r + T, E + L:E + 2 * L]                          # (T, L)

        acc = jnp.zeros((T, E), jnp.float32)                         # out-proj accumulator
        for h in range(num_heads):
            qh = qb[:, h * head_dim:(h + 1) * head_dim]              # (T, Dh)
            kh = kb[:, h * latent_head_dim:(h + 1) * latent_head_dim]
            vh = vb[:, h * latent_head_dim:(h + 1) * latent_head_dim]

            s = lax.dot_general(qh, kh, nt_dims,
                                preferred_element_type=jnp.float32)  # (T, T)
            s = s - jnp.max(s, axis=-1, keepdims=True)
            e = jnp.exp(s)
            p_attn = e / jnp.sum(e, axis=-1, keepdims=True)          # exact softmax
            oh = jnp.dot(p_attn, vh,
                         preferred_element_type=jnp.float32)         # (T, Ld)
            # Accumulate directly through the per-head slice of W_out:
            # out = sum_h oh @ W_out^T[h*Ld:(h+1)*Ld, :]   (no concat).
            acc = acc + jnp.dot(oh, wout_ref[h],
                                preferred_element_type=jnp.float32)  # (T, E)

        o_ref[b] = (acc + bout).astype(o_ref.dtype)


# ------------------------------- wrapper ------------------------------------ #

@partial(jax.jit, static_argnames=("num_heads",))
def mla_forward(fused, x, *, num_heads):
    """x: (B, T, E) f32 -> (B, T, E) f32."""
    B, T, E = x.shape
    H, Ld, _ = fused["w_out"].shape
    L = H * Ld
    head_dim = E // num_heads
    latent_head_dim = L // num_heads
    assert head_dim * num_heads == E, "embed_dim must be divisible by num_heads"
    # The torch reference's Q @ K_latent^T implicitly requires this:
    assert latent_head_dim == head_dim, (
        "MultiHeadLatentAttentionCustom requires latent_dim == embed_dim "
        "(latent_dim//num_heads must equal head_dim)")

    N = E + 2 * L
    x2 = x.reshape(B * T, E)           # free (contiguous) reshape outside the kernel

    kernel = partial(_mla_kernel, B=B, T=T, num_heads=num_heads,
                     head_dim=head_dim, latent_head_dim=latent_head_dim)

    out = pl.pallas_call(
        kernel,
        out_shape=jax.ShapeDtypeStruct((B, T, E), jnp.float32),
        grid=(1,),                                          # single step: overhead-bound shapes
        in_specs=[
            pl.BlockSpec((B * T, E), lambda i: (0, 0)),     # x (batch folded into rows)
            pl.BlockSpec((E, N), lambda i: (0, 0)),         # fused W: [q*scale | k@lat | v@lat]
            pl.BlockSpec((1, N), lambda i: (0, 0)),         # fused bias
            pl.BlockSpec((num_heads, latent_head_dim, E), lambda i: (0, 0, 0)),  # W_out per head
            pl.BlockSpec((1, E), lambda i: (0, 0)),         # b_out
        ],
        out_specs=pl.BlockSpec((B, T, E), lambda i: (0, 0, 0)),
        compiler_params=pltpu.CompilerParams(
            dimension_semantics=("arbitrary",)),
    )(x2, fused["w_proj"], fused["b_proj"], fused["w_out"], fused["b_out"])
    return out


# --------------------------- params (torch-equivalent) ---------------------- #

def init_params(key, embed_dim, latent_dim):
    """Random Linear params; torch layout is (out, in) + (out,)."""
    def nrm(k, shape, scale=0.05):
        return scale * jax.random.normal(k, shape, dtype=jnp.float32)

    ks = jax.random.split(key, 10)
    return {
        "W_q": nrm(ks[0], (embed_dim, embed_dim)),  "b_q": nrm(ks[1], (embed_dim,)),
        "W_k": nrm(ks[2], (embed_dim, embed_dim)),  "b_k": nrm(ks[3], (embed_dim,)),
        "W_v": nrm(ks[4], (embed_dim, embed_dim)),  "b_v": nrm(ks[5], (embed_dim,)),
        "W_lat": nrm(ks[6], (latent_dim, embed_dim)), "b_lat": nrm(ks[7], (latent_dim,)),
        "W_out": nrm(ks[8], (embed_dim, latent_dim)), "b_out": nrm(ks[9], (embed_dim,)),
    }


def fuse_params(p, num_heads):
    """One-time offline prep (NOT in the per-call path):
       - transpose everything to (in, out) layout
       - fold 1/sqrt(head_dim) into W_q / b_q
       - fold the latent projection into W_k / W_v (forward pass is linear here)
       - pre-split W_out per head to kill the in-kernel concat."""
    E = p["W_q"].shape[0]
    L = p["W_lat"].shape[0]
    head_dim = E // num_heads
    latent_head_dim = L // num_heads
    scale = 1.0 / math.sqrt(head_dim)

    w_lat_t = p["W_lat"].T                                   # (E, L)
    w_q = p["W_q"].T * scale                                 # (E, E)
    b_q = p["b_q"] * scale                                   # (E,)
    w_kl = p["W_k"].T @ w_lat_t                              # (E, L)
    b_kl = p["b_k"] @ w_lat_t + p["b_lat"]                   # (L,)
    w_vl = p["W_v"].T @ w_lat_t                              # (E, L)
    b_vl = p["b_v"] @ w_lat_t + p["b_lat"]                   # (L,)

    w_proj = jnp.concatenate([w_q, w_kl, w_vl], axis=1)      # (E, E+2L)
    b_proj = jnp.concatenate([b_q, b_kl, b_vl])[None, :]     # (1, E+2L)
    w_out = p["W_out"].T.reshape(num_heads, latent_head_dim, E)   # (H, Ld, E)
    b_out = p["b_out"][None, :]                              # (1, E)
    return {"w_proj": w_proj, "b_proj": b_proj, "w_out": w_out, "b_out": b_out}


# ----------------------- pure-JAX reference (sanity) ------------------------ #

def mla_reference(p, x, num_heads):
    B, T, E = x.shape
    L = p["W_lat"].shape[0]
    Dh, Ld = E // num_heads, L // num_heads
    Q = x @ p["W_q"].T + p["b_q"]
    K = x @ p["W_k"].T + p["b_k"]
    V = x @ p["W_v"].T + p["b_v"]
    K_lat = K @ p["W_lat"].T + p["b_lat"]
    V_lat = V @ p["W_lat"].T + p["b_lat"]
    Q = Q.reshape(B, T, num_heads, Dh).transpose(0, 2, 1, 3)
    K_lat = K_lat.reshape(B, T, num_heads, Ld).transpose(0, 2, 1, 3)
    V_lat = V_lat.reshape(B, T, num_heads, Ld).transpose(0, 2, 1, 3)
    s = jnp.einsum("bhtd,bhsd->bhts", Q, K_lat) / math.sqrt(Dh)
    a = jax.nn.softmax(s, axis=-1)
    o = jnp.einsum("bhts,bhsd->bhtd", a, V_lat)
    o = o.transpose(0, 2, 1, 3).reshape(B, T, L)
    return o @ p["W_out"].T + p["b_out"]


# ----------------------------------- main ----------------------------------- #

if __name__ == "__main__":
    embed_dim, num_heads, latent_dim = 32, 4, 32   # latent_dim == embed_dim (see note)
    B, T = 2, 8

    root = jax.random.PRNGKey(0)
    k_params, k_x = jax.random.split(root)

    params = init_params(k_params, embed_dim, latent_dim)
    fused = fuse_params(params, num_heads)
    x = jax.random.normal(k_x, (B, T, embed_dim), dtype=jnp.float32)

    out = mla_forward(fused, x, num_heads=num_heads)
    jax.block_until_ready(out)

    assert out.shape == (B, T, embed_dim)
    assert bool(jnp.all(jnp.isfinite(out)))

    # Numerical check against a pure-JAX port of the torch forward.
    ref = mla_reference(params, x, num_heads)
    err = float(jnp.max(jnp.abs(out - ref)))
    assert err < 1e-4, f"mismatch vs reference: {err}"

    print("KERNEL_OK")
</pallas_src>

<mosaic_0001>
module attributes {stable_mosaic.version = 11 : i64} {
  func.func @_mla_kernel(%arg0: i32, %arg1: memref<16x32xf32, #tpu.memory_space<vmem>>, %arg2: memref<32x96xf32, #tpu.memory_space<vmem>>, %arg3: memref<1x96xf32, #tpu.memory_space<vmem>>, %arg4: memref<4x8x32xf32, #tpu.memory_space<vmem>>, %arg5: memref<1x32xf32, #tpu.memory_space<vmem>>, %arg6: memref<2x8x32xf32, #tpu.memory_space<vmem>>) attributes {dimension_semantics = [#tpu.dimension_semantics<arbitrary>], iteration_bounds = array<i64: 1>, scalar_prefetch = 0 : i64, scratch_operands = 0 : i64, tpu.core_type = #tpu.core_type<tc>, window_params = [{pipeline_mode = #tpu.pipeline_mode<synchronous>, transform_indices = @transform_0, window_bounds = array<i64: 16, 32>}, {pipeline_mode = #tpu.pipeline_mode<synchronous>, transform_indices = @transform_1, window_bounds = array<i64: 32, 96>}, {pipeline_mode = #tpu.pipeline_mode<synchronous>, transform_indices = @transform_2, window_bounds = array<i64: 1, 96>}, {pipeline_mode = #tpu.pipeline_mode<synchronous>, transform_indices = @transform_3, window_bounds = array<i64: 4, 8, 32>}, {pipeline_mode = #tpu.pipeline_mode<synchronous>, transform_indices = @transform_4, window_bounds = array<i64: 1, 32>}, {pipeline_mode = #tpu.pipeline_mode<synchronous>, transform_indices = @transform_5, window_bounds = array<i64: 2, 8, 32>}]} {
    %c0 = arith.constant 0 : index
    %c0_0 = arith.constant 0 : index
    %0 = vector.load %arg1[%c0, %c0_0] : memref<16x32xf32, #tpu.memory_space<vmem>>, vector<16x32xf32>
    %c0_1 = arith.constant 0 : index
    %c0_2 = arith.constant 0 : index
    %1 = vector.load %arg2[%c0_1, %c0_2] : memref<32x96xf32, #tpu.memory_space<vmem>>, vector<32x96xf32>
    %cst = arith.constant dense<0.000000e+00> : vector<16x96xf32>
    %2 = tpu.matmul %0, %1, %cst {dimension_numbers = #tpu.dot_dimension_numbers<[1], [0], [0], [1], [0, 0, 1, 1], [], []>} : vector<16x32xf32>, vector<32x96xf32>, vector<16x96xf32> -> vector<16x96xf32>
    %c0_3 = arith.constant 0 : index
    %c0_4 = arith.constant 0 : index
    %3 = vector.load %arg3[%c0_3, %c0_4] : memref<1x96xf32, #tpu.memory_space<vmem>>, vector<1x96xf32>
    %4 = vector.broadcast %3 : vector<1x96xf32> to vector<16x96xf32>
    %5 = arith.addf %2, %4 : vector<16x96xf32>
    %c0_5 = arith.constant 0 : index
    %c0_6 = arith.constant 0 : index
    %6 = vector.load %arg5[%c0_5, %c0_6] : memref<1x32xf32, #tpu.memory_space<vmem>>, vector<1x32xf32>
    %7 = vector.extract_strided_slice %5 {offsets = [0, 0], sizes = [8, 32], strides = [1, 1]} : vector<16x96xf32> to vector<8x32xf32>
    %8 = vector.extract_strided_slice %5 {offsets = [0, 32], sizes = [8, 32], strides = [1, 1]} : vector<16x96xf32> to vector<8x32xf32>
    %9 = vector.extract_strided_slice %5 {offsets = [0, 64], sizes = [8, 32], strides = [1, 1]} : vector<16x96xf32> to vector<8x32xf32>
    %cst_7 = arith.constant 0.000000e+00 : f32
    %10 = vector.broadcast %cst_7 : f32 to vector<8x32xf32>
    %11 = vector.extract_strided_slice %7 {offsets = [0, 0], sizes = [8, 8], strides = [1, 1]} : vector<8x32xf32> to vector<8x8xf32>
    %12 = vector.extract_strided_slice %8 {offsets = [0, 0], sizes = [8, 8], strides = [1, 1]} : vector<8x32xf32> to vector<8x8xf32>
    %13 = vector.extract_strided_slice %9 {offsets = [0, 0], sizes = [8, 8], strides = [1, 1]} : vector<8x32xf32> to vector<8x8xf32>
    %cst_8 = arith.constant dense<0.000000e+00> : vector<8x8xf32>
    %14 = tpu.matmul %11, %12, %cst_8 {dimension_numbers = #tpu.dot_dimension_numbers<[1], [1], [0], [0], [0, 0, 1, 0], [], []>} : vector<8x8xf32>, vector<8x8xf32>, vector<8x8xf32> -> vector<8x8xf32>
    %cst_9 = arith.constant dense<0xFF800000> : vector<8xf32>
    %15 = vector.multi_reduction <maximumf>, %14, %cst_9 [1] : vector<8x8xf32> to vector<8xf32>
    %16 = vector.shape_cast %15 : vector<8xf32> to vector<8x1xf32>
    %17 = vector.broadcast %16 : vector<8x1xf32> to vector<8x8xf32>
    %18 = arith.subf %14, %17 : vector<8x8xf32>
    %19 = math.exp %18 : vector<8x8xf32>
    %cst_10 = arith.constant dense<0.000000e+00> : vector<8xf32>
    %20 = vector.multi_reduction <add>, %19, %cst_10 [1] : vector<8x8xf32> to vector<8xf32>
    %21 = vector.shape_cast %20 : vector<8xf32> to vector<8x1xf32>
    %22 = vector.broadcast %21 : vector<8x1xf32> to vector<8x8xf32>
    %23 = arith.divf %19, %22 : vector<8x8xf32>
    %cst_11 = arith.constant dense<0.000000e+00> : vector<8x8xf32>
    %24 = tpu.matmul %23, %13, %cst_11 {dimension_numbers = #tpu.dot_dimension_numbers<[1], [0], [0], [1], [0, 0, 1, 1], [], []>} : vector<8x8xf32>, vector<8x8xf32>, vector<8x8xf32> -> vector<8x8xf32>
    %c0_12 = arith.constant 0 : index
    %c0_13 = arith.constant 0 : index
    %c0_14 = arith.constant 0 : index
    %25 = vector.load %arg4[%c0_12, %c0_13, %c0_14] : memref<4x8x32xf32, #tpu.memory_space<vmem>>, vector<1x8x32xf32>
    %26 = vector.shape_cast %25 : vector<1x8x32xf32> to vector<8x32xf32>
    %cst_15 = arith.constant dense<0.000000e+00> : vector<8x32xf32>
    %27 = tpu.matmul %24, %26, %cst_15 {dimension_numbers = #tpu.dot_dimension_numbers<[1], [0], [0], [1], [0, 0, 1, 1], [], []>} : vector<8x8xf32>, vector<8x32xf32>, vector<8x32xf32> -> vector<8x32xf32>
    %28 = arith.addf %10, %27 : vector<8x32xf32>
    %29 = vector.extract_strided_slice %7 {offsets = [0, 8], sizes = [8, 8], strides = [1, 1]} : vector<8x32xf32> to vector<8x8xf32>
    %30 = vector.extract_strided_slice %8 {offsets = [0, 8], sizes = [8, 8], strides = [1, 1]} : vector<8x32xf32> to vector<8x8xf32>
    %31 = vector.extract_strided_slice %9 {offsets = [0, 8], sizes = [8, 8], strides = [1, 1]} : vector<8x32xf32> to vector<8x8xf32>
    %cst_16 = arith.constant dense<0.000000e+00> : vector<8x8xf32>
    %32 = tpu.matmul %29, %30, %cst_16 {dimension_numbers = #tpu.dot_dimension_numbers<[1], [1], [0], [0], [0, 0, 1, 0], [], []>} : vector<8x8xf32>, vector<8x8xf32>, vector<8x8xf32> -> vector<8x8xf32>
    %cst_17 = arith.constant dense<0xFF800000> : vector<8xf32>
    %33 = vector.multi_reduction <maximumf>, %32, %cst_17 [1] : vector<8x8xf32> to vector<8xf32>
    %34 = vector.shape_cast %33 : vector<8xf32> to vector<8x1xf32>
    %35 = vector.broadcast %34 : vector<8x1xf32> to vector<8x8xf32>
    %36 = arith.subf %32, %35 : vector<8x8xf32>
    %37 = math.exp %36 : vector<8x8xf32>
    %cst_18 = arith.constant dense<0.000000e+00> : vector<8xf32>
    %38 = vector.multi_reduction <add>, %37, %cst_18 [1] : vector<8x8xf32> to vector<8xf32>
    %39 = vector.shape_cast %38 : vector<8xf32> to vector<8x1xf32>
    %40 = vector.broadcast %39 : vector<8x1xf32> to vector<8x8xf32>
    %41 = arith.divf %37, %40 : vector<8x8xf32>
    %cst_19 = arith.constant dense<0.000000e+00> : vector<8x8xf32>
    %42 = tpu.matmul %41, %31, %cst_19 {dimension_numbers = #tpu.dot_dimension_numbers<[1], [0], [0], [1], [0, 0, 1, 1], [], []>} : vector<8x8xf32>, vector<8x8xf32>, vector<8x8xf32> -> vector<8x8xf32>
    %c1 = arith.constant 1 : index
    %c0_20 = arith.constant 0 : index
    %c0_21 = arith.constant 0 : index
    %43 = vector.load %arg4[%c1, %c0_20, %c0_21] : memref<4x8x32xf32, #tpu.memory_space<vmem>>, vector<1x8x32xf32>
    %44 = vector.shape_cast %43 : vector<1x8x32xf32> to vector<8x32xf32>
    %cst_22 = arith.constant dense<0.000000e+00> : vector<8x32xf32>
    %45 = tpu.matmul %42, %44, %cst_22 {dimension_numbers = #tpu.dot_dimension_numbers<[1], [0], [0], [1], [0, 0, 1, 1], [], []>} : vector<8x8xf32>, vector<8x32xf32>, vector<8x32xf32> -> vector<8x32xf32>
    %46 = arith.addf %28, %45 : vector<8x32xf32>
    %47 = vector.extract_strided_slice %7 {offsets = [0, 16], sizes = [8, 8], strides = [1, 1]} : vector<8x32xf32> to vector<8x8xf32>
    %48 = vector.extract_strided_slice %8 {offsets = [0, 16], sizes = [8, 8], strides = [1, 1]} : vector<8x32xf32> to vector<8x8xf32>
    %49 = vector.extract_strided_slice %9 {offsets = [0, 16], sizes = [8, 8], strides = [1, 1]} : vector<8x32xf32> to vector<8x8xf32>
    %cst_23 = arith.constant dense<0.000000e+00> : vector<8x8xf32>
    %50 = tpu.matmul %47, %48, %cst_23 {dimension_numbers = #tpu.dot_dimension_numbers<[1], [1], [0], [0], [0, 0, 1, 0], [], []>} : vector<8x8xf32>, vector<8x8xf32>, vector<8x8xf32> -> vector<8x8xf32>
    %cst_24 = arith.constant dense<0xFF800000> : vector<8xf32>
    %51 = vector.multi_reduction <maximumf>, %50, %cst_24 [1] : vector<8x8xf32> to vector<8xf32>
    %52 = vector.shape_cast %51 : vector<8xf32> to vector<8x1xf32>
    %53 = vector.broadcast %52 : vector<8x1xf32> to vector<8x8xf32>
    %54 = arith.subf %50, %53 : vector<8x8xf32>
    %55 = math.exp %54 : vector<8x8xf32>
    %cst_25 = arith.constant dense<0.000000e+00> : vector<8xf32>
    %56 = vector.multi_reduction <add>, %55, %cst_25 [1] : vector<8x8xf32> to vector<8xf32>
    %57 = vector.shape_cast %56 : vector<8xf32> to vector<8x1xf32>
    %58 = vector.broadcast %57 : vector<8x1xf32> to vector<8x8xf32>
    %59 = arith.divf %55, %58 : vector<8x8xf32>
    %cst_26 = arith.constant dense<0.000000e+00> : vector<8x8xf32>
    %60 = tpu.matmul %59, %49, %cst_26 {dimension_numbers = #tpu.dot_dimension_numbers<[1], [0], [0], [1], [0, 0, 1, 1], [], []>} : vector<8x8xf32>, vector<8x8xf32>, vector<8x8xf32> -> vector<8x8xf32>
    %c2 = arith.constant 2 : index
    %c0_27 = arith.constant 0 : index
    %c0_28 = arith.constant 0 : index
    %61 = vector.load %arg4[%c2, %c0_27, %c0_28] : memref<4x8x32xf32, #tpu.memory_space<vmem>>, vector<1x8x32xf32>
    %62 = vector.shape_cast %61 : vector<1x8x32xf32> to vector<8x32xf32>
    %cst_29 = arith.constant dense<0.000000e+00> : vector<8x32xf32>
    %63 = tpu.matmul %60, %62, %cst_29 {dimension_numbers = #tpu.dot_dimension_numbers<[1], [0], [0], [1], [0, 0, 1, 1], [], []>} : vector<8x8xf32>, vector<8x32xf32>, vector<8x32xf32> -> vector<8x32xf32>
    %64 = arith.addf %46, %63 : vector<8x32xf32>
    %65 = vector.extract_strided_slice %7 {offsets = [0, 24], sizes = [8, 8], strides = [1, 1]} : vector<8x32xf32> to vector<8x8xf32>
    %66 = vector.extract_strided_slice %8 {offsets = [0, 24], sizes = [8, 8], strides = [1, 1]} : vector<8x32xf32> to vector<8x8xf32>
    %67 = vector.extract_strided_slice %9 {offsets = [0, 24], sizes = [8, 8], strides = [1, 1]} : vector<8x32xf32> to vector<8x8xf32>
    %cst_30 = arith.constant dense<0.000000e+00> : vector<8x8xf32>
    %68 = tpu.matmul %65, %66, %cst_30 {dimension_numbers = #tpu.dot_dimension_numbers<[1], [1], [0], [0], [0, 0, 1, 0], [], []>} : vector<8x8xf32>, vector<8x8xf32>, vector<8x8xf32> -> vector<8x8xf32>
    %cst_31 = arith.constant dense<0xFF800000> : vector<8xf32>
    %69 = vector.multi_reduction <maximumf>, %68, %cst_31 [1] : vector<8x8xf32> to vector<8xf32>
    %70 = vector.shape_cast %69 : vector<8xf32> to vector<8x1xf32>
    %71 = vector.broadcast %70 : vector<8x1xf32> to vector<8x8xf32>
    %72 = arith.subf %68, %71 : vector<8x8xf32>
    %73 = math.exp %72 : vector<8x8xf32>
    %cst_32 = arith.constant dense<0.000000e+00> : vector<8xf32>
    %74 = vector.multi_reduction <add>, %73, %cst_32 [1] : vector<8x8xf32> to vector<8xf32>
    %75 = vector.shape_cast %74 : vector<8xf32> to vector<8x1xf32>
    %76 = vector.broadcast %75 : vector<8x1xf32> to vector<8x8xf32>
    %77 = arith.divf %73, %76 : vector<8x8xf32>
    %cst_33 = arith.constant dense<0.000000e+00> : vector<8x8xf32>
    %78 = tpu.matmul %77, %67, %cst_33 {dimension_numbers = #tpu.dot_dimension_numbers<[1], [0], [0], [1], [0, 0, 1, 1], [], []>} : vector<8x8xf32>, vector<8x8xf32>, vector<8x8xf32> -> vector<8x8xf32>
    %c3 = arith.constant 3 : index
    %c0_34 = arith.constant 0 : index
    %c0_35 = arith.constant 0 : index
    %79 = vector.load %arg4[%c3, %c0_34, %c0_35] : memref<4x8x32xf32, #tpu.memory_space<vmem>>, vector<1x8x32xf32>
    %80 = vector.shape_cast %79 : vector<1x8x32xf32> to vector<8x32xf32>
    %cst_36 = arith.constant dense<0.000000e+00> : vector<8x32xf32>
    %81 = tpu.matmul %78, %80, %cst_36 {dimension_numbers = #tpu.dot_dimension_numbers<[1], [0], [0], [1], [0, 0, 1, 1], [], []>} : vector<8x8xf32>, vector<8x32xf32>, vector<8x32xf32> -> vector<8x32xf32>
    %82 = arith.addf %64, %81 : vector<8x32xf32>
    %83 = vector.broadcast %6 : vector<1x32xf32> to vector<8x32xf32>
    %84 = arith.addf %82, %83 : vector<8x32xf32>
    %c0_37 = arith.constant 0 : index
    %c0_38 = arith.constant 0 : index
    %c0_39 = arith.constant 0 : index
    %85 = vector.load %arg6[%c0_37, %c0_38, %c0_39] : memref<2x8x32xf32, #tpu.memory_space<vmem>>, vector<1x8x32xf32>
    %86 = vector.shape_cast %85 : vector<1x8x32xf32> to vector<8x32xf32>
    %87 = vector.shape_cast %84 : vector<8x32xf32> to vector<1x8x32xf32>
    tpu.vector_store %arg6[%c0_37, %c0_38, %c0_39], %87 {strides = array<i32>} : memref<2x8x32xf32, #tpu.memory_space<vmem>>, vector<1x8x32xf32>,
    %88 = vector.extract_strided_slice %5 {offsets = [8, 0], sizes = [8, 32], strides = [1, 1]} : vector<16x96xf32> to vector<8x32xf32>
    %89 = vector.extract_strided_slice %5 {offsets = [8, 32], sizes = [8, 32], strides = [1, 1]} : vector<16x96xf32> to vector<8x32xf32>
    %90 = vector.extract_strided_slice %5 {offsets = [8, 64], sizes = [8, 32], strides = [1, 1]} : vector<16x96xf32> to vector<8x32xf32>
    %cst_40 = arith.constant 0.000000e+00 : f32
    %91 = vector.broadcast %cst_40 : f32 to vector<8x32xf32>
    %92 = vector.extract_strided_slice %88 {offsets = [0, 0], sizes = [8, 8], strides = [1, 1]} : vector<8x32xf32> to vector<8x8xf32>
    %93 = vector.extract_strided_slice %89 {offsets = [0, 0], sizes = [8, 8], strides = [1, 1]} : vector<8x32xf32> to vector<8x8xf32>
    %94 = vector.extract_strided_slice %90 {offsets = [0, 0], sizes = [8, 8], strides = [1, 1]} : vector<8x32xf32> to vector<8x8xf32>
    %cst_41 = arith.constant dense<0.000000e+00> : vector<8x8xf32>
    %95 = tpu.matmul %92, %93, %cst_41 {dimension_numbers = #tpu.dot_dimension_numbers<[1], [1], [0], [0], [0, 0, 1, 0], [], []>} : vector<8x8xf32>, vector<8x8xf32>, vector<8x8xf32> -> vector<8x8xf32>
    %cst_42 = arith.constant dense<0xFF800000> : vector<8xf32>
    %96 = vector.multi_reduction <maximumf>, %95, %cst_42 [1] : vector<8x8xf32> to vector<8xf32>
    %97 = vector.shape_cast %96 : vector<8xf32> to vector<8x1xf32>
    %98 = vector.broadcast %97 : vector<8x1xf32> to vector<8x8xf32>
    %99 = arith.subf %95, %98 : vector<8x8xf32>
    %100 = math.exp %99 : vector<8x8xf32>
    %cst_43 = arith.constant dense<0.000000e+00> : vector<8xf32>
    %101 = vector.multi_reduction <add>, %100, %cst_43 [1] : vector<8x8xf32> to vector<8xf32>
    %102 = vector.shape_cast %101 : vector<8xf32> to vector<8x1xf32>
    %103 = vector.broadcast %102 : vector<8x1xf32> to vector<8x8xf32>
    %104 = arith.divf %100, %103 : vector<8x8xf32>
    %cst_44 = arith.constant dense<0.000000e+00> : vector<8x8xf32>
    %105 = tpu.matmul %104, %94, %cst_44 {dimension_numbers = #tpu.dot_dimension_numbers<[1], [0], [0], [1], [0, 0, 1, 1], [], []>} : vector<8x8xf32>, vector<8x8xf32>, vector<8x8xf32> -> vector<8x8xf32>
    %c0_45 = arith.constant 0 : index
    %c0_46 = arith.constant 0 : index
    %c0_47 = arith.constant 0 : index
    %106 = vector.load %arg4[%c0_45, %c0_46, %c0_47] : memref<4x8x32xf32, #tpu.memory_space<vmem>>, vector<1x8x32xf32>
    %107 = vector.shape_cast %106 : vector<1x8x32xf32> to vector<8x32xf32>
    %cst_48 = arith.constant dense<0.000000e+00> : vector<8x32xf32>
    %108 = tpu.matmul %105, %107, %cst_48 {dimension_numbers = #tpu.dot_dimension_numbers<[1], [0], [0], [1], [0, 0, 1, 1], [], []>} : vector<8x8xf32>, vector<8x32xf32>, vector<8x32xf32> -> vector<8x32xf32>
    %109 = arith.addf %91, %108 : vector<8x32xf32>
    %110 = vector.extract_strided_slice %88 {offsets = [0, 8], sizes = [8, 8], strides = [1, 1]} : vector<8x32xf32> to vector<8x8xf32>
    %111 = vector.extract_strided_slice %89 {offsets = [0, 8], sizes = [8, 8], strides = [1, 1]} : vector<8x32xf32> to vector<8x8xf32>
    %112 = vector.extract_strided_slice %90 {offsets = [0, 8], sizes = [8, 8], strides = [1, 1]} : vector<8x32xf32> to vector<8x8xf32>
    %cst_49 = arith.constant dense<0.000000e+00> : vector<8x8xf32>
    %113 = tpu.matmul %110, %111, %cst_49 {dimension_numbers = #tpu.dot_dimension_numbers<[1], [1], [0], [0], [0, 0, 1, 0], [], []>} : vector<8x8xf32>, vector<8x8xf32>, vector<8x8xf32> -> vector<8x8xf32>
    %cst_50 = arith.constant dense<0xFF800000> : vector<8xf32>
    %114 = vector.multi_reduction <maximumf>, %113, %cst_50 [1] : vector<8x8xf32> to vector<8xf32>
    %115 = vector.shape_cast %114 : vector<8xf32> to vector<8x1xf32>
    %116 = vector.broadcast %115 : vector<8x1xf32> to vector<8x8xf32>
    %117 = arith.subf %113, %116 : vector<8x8xf32>
    %118 = math.exp %117 : vector<8x8xf32>
    %cst_51 = arith.constant dense<0.000000e+00> : vector<8xf32>
    %119 = vector.multi_reduction <add>, %118, %cst_51 [1] : vector<8x8xf32> to vector<8xf32>
    %120 = vector.shape_cast %119 : vector<8xf32> to vector<8x1xf32>
    %121 = vector.broadcast %120 : vector<8x1xf32> to vector<8x8xf32>
    %122 = arith.divf %118, %121 : vector<8x8xf32>
    %cst_52 = arith.constant dense<0.000000e+00> : vector<8x8xf32>
    %123 = tpu.matmul %122, %112, %cst_52 {dimension_numbers = #tpu.dot_dimension_numbers<[1], [0], [0], [1], [0, 0, 1, 1], [], []>} : vector<8x8xf32>, vector<8x8xf32>, vector<8x8xf32> -> vector<8x8xf32>
    %c1_53 = arith.constant 1 : index
    %c0_54 = arith.constant 0 : index
    %c0_55 = arith.constant 0 : index
    %124 = vector.load %arg4[%c1_53, %c0_54, %c0_55] : memref<4x8x32xf32, #tpu.memory_space<vmem>>, vector<1x8x32xf32>
    %125 = vector.shape_cast %124 : vector<1x8x32xf32> to vector<8x32xf32>
    %cst_56 = arith.constant dense<0.000000e+00> : vector<8x32xf32>
    %126 = tpu.matmul %123, %125, %cst_56 {dimension_numbers = #tpu.dot_dimension_numbers<[1], [0], [0], [1], [0, 0, 1, 1], [], []>} : vector<8x8xf32>, vector<8x32xf32>, vector<8x32xf32> -> vector<8x32xf32>
    %127 = arith.addf %109, %126 : vector<8x32xf32>
    %128 = vector.extract_strided_slice %88 {offsets = [0, 16], sizes = [8, 8], strides = [1, 1]} : vector<8x32xf32> to vector<8x8xf32>
    %129 = vector.extract_strided_slice %89 {offsets = [0, 16], sizes = [8, 8], strides = [1, 1]} : vector<8x32xf32> to vector<8x8xf32>
    %130 = vector.extract_strided_slice %90 {offsets = [0, 16], sizes = [8, 8], strides = [1, 1]} : vector<8x32xf32> to vector<8x8xf32>
    %cst_57 = arith.constant dense<0.000000e+00> : vector<8x8xf32>
    %131 = tpu.matmul %128, %129, %cst_57 {dimension_numbers = #tpu.dot_dimension_numbers<[1], [1], [0], [0], [0, 0, 1, 0], [], []>} : vector<8x8xf32>, vector<8x8xf32>, vector<8x8xf32> -> vector<8x8xf32>
    %cst_58 = arith.constant dense<0xFF800000> : vector<8xf32>
    %132 = vector.multi_reduction <maximumf>, %131, %cst_58 [1] : vector<8x8xf32> to vector<8xf32>
    %133 = vector.shape_cast %132 : vector<8xf32> to vector<8x1xf32>
    %134 = vector.broadcast %133 : vector<8x1xf32> to vector<8x8xf32>
    %135 = arith.subf %131, %134 : vector<8x8xf32>
    %136 = math.exp %135 : vector<8x8xf32>
    %cst_59 = arith.constant dense<0.000000e+00> : vector<8xf32>
    %137 = vector.multi_reduction <add>, %136, %cst_59 [1] : vector<8x8xf32> to vector<8xf32>
    %138 = vector.shape_cast %137 : vector<8xf32> to vector<8x1xf32>
    %139 = vector.broadcast %138 : vector<8x1xf32> to vector<8x8xf32>
    %140 = arith.divf %136, %139 : vector<8x8xf32>
    %cst_60 = arith.constant dense<0.000000e+00> : vector<8x8xf32>
    %141 = tpu.matmul %140, %130, %cst_60 {dimension_numbers = #tpu.dot_dimension_numbers<[1], [0], [0], [1], [0, 0, 1, 1], [], []>} : vector<8x8xf32>, vector<8x8xf32>, vector<8x8xf32> -> vector<8x8xf32>
    %c2_61 = arith.constant 2 : index
    %c0_62 = arith.constant 0 : index
    %c0_63 = arith.constant 0 : index
    %142 = vector.load %arg4[%c2_61, %c0_62, %c0_63] : memref<4x8x32xf32, #tpu.memory_space<vmem>>, vector<1x8x32xf32>
    %143 = vector.shape_cast %142 : vector<1x8x32xf32> to vector<8x32xf32>
    %cst_64 = arith.constant dense<0.000000e+00> : vector<8x32xf32>
    %144 = tpu.matmul %141, %143, %cst_64 {dimension_numbers = #tpu.dot_dimension_numbers<[1], [0], [0], [1], [0, 0, 1, 1], [], []>} : vector<8x8xf32>, vector<8x32xf32>, vector<8x32xf32> -> vector<8x32xf32>
    %145 = arith.addf %127, %144 : vector<8x32xf32>
    %146 = vector.extract_strided_slice %88 {offsets = [0, 24], sizes = [8, 8], strides = [1, 1]} : vector<8x32xf32> to vector<8x8xf32>
    %147 = vector.extract_strided_slice %89 {offsets = [0, 24], sizes = [8, 8], strides = [1, 1]} : vector<8x32xf32> to vector<8x8xf32>
    %148 = vector.extract_strided_slice %90 {offsets = [0, 24], sizes = [8, 8], strides = [1, 1]} : vector<8x32xf32> to vector<8x8xf32>
    %cst_65 = arith.constant dense<0.000000e+00> : vector<8x8xf32>
    %149 = tpu.matmul %146, %147, %cst_65 {dimension_numbers = #tpu.dot_dimension_numbers<[1], [1], [0], [0], [0, 0, 1, 0], [], []>} : vector<8x8xf32>, vector<8x8xf32>, vector<8x8xf32> -> vector<8x8xf32>
    %cst_66 = arith.constant dense<0xFF800000> : vector<8xf32>
    %150 = vector.multi_reduction <maximumf>, %149, %cst_66 [1] : vector<8x8xf32> to vector<8xf32>
    %151 = vector.shape_cast %150 : vector<8xf32> to vector<8x1xf32>
    %152 = vector.broadcast %151 : vector<8x1xf32> to vector<8x8xf32>
    %153 = arith.subf %149, %152 : vector<8x8xf32>
    %154 = math.exp %153 : vector<8x8xf32>
    %cst_67 = arith.constant dense<0.000000e+00> : vector<8xf32>
    %155 = vector.multi_reduction <add>, %154, %cst_67 [1] : vector<8x8xf32> to vector<8xf32>
    %156 = vector.shape_cast %155 : vector<8xf32> to vector<8x1xf32>
    %157 = vector.broadcast %156 : vector<8x1xf32> to vector<8x8xf32>
    %158 = arith.divf %154, %157 : vector<8x8xf32>
    %cst_68 = arith.constant dense<0.000000e+00> : vector<8x8xf32>
    %159 = tpu.matmul %158, %148, %cst_68 {dimension_numbers = #tpu.dot_dimension_numbers<[1], [0], [0], [1], [0, 0, 1, 1], [], []>} : vector<8x8xf32>, vector<8x8xf32>, vector<8x8xf32> -> vector<8x8xf32>
    %c3_69 = arith.constant 3 : index
    %c0_70 = arith.constant 0 : index
    %c0_71 = arith.constant 0 : index
    %160 = vector.load %arg4[%c3_69, %c0_70, %c0_71] : memref<4x8x32xf32, #tpu.memory_space<vmem>>, vector<1x8x32xf32>
    %161 = vector.shape_cast %160 : vector<1x8x32xf32> to vector<8x32xf32>
    %cst_72 = arith.constant dense<0.000000e+00> : vector<8x32xf32>
    %162 = tpu.matmul %159, %161, %cst_72 {dimension_numbers = #tpu.dot_dimension_numbers<[1], [0], [0], [1], [0, 0, 1, 1], [], []>} : vector<8x8xf32>, vector<8x32xf32>, vector<8x32xf32> -> vector<8x32xf32>
    %163 = arith.addf %145, %162 : vector<8x32xf32>
    %164 = vector.broadcast %6 : vector<1x32xf32> to vector<8x32xf32>
    %165 = arith.addf %163, %164 : vector<8x32xf32>
    %c1_73 = arith.constant 1 : index
    %c0_74 = arith.constant 0 : index
    %c0_75 = arith.constant 0 : index
    %166 = vector.load %arg6[%c1_73, %c0_74, %c0_75] : memref<2x8x32xf32, #tpu.memory_space<vmem>>, vector<1x8x32xf32>
    %167 = vector.shape_cast %166 : vector<1x8x32xf32> to vector<8x32xf32>
    %168 = vector.shape_cast %165 : vector<8x32xf32> to vector<1x8x32xf32>
    tpu.vector_store %arg6[%c1_73, %c0_74, %c0_75], %168 {strides = array<i32>} : memref<2x8x32xf32, #tpu.memory_space<vmem>>, vector<1x8x32xf32>,
    return
  }
  func.func @transform_0(%arg0: i32) -> (i32, i32) {
    %c0_i32 = arith.constant 0 : i32
    %c0_i32_0 = arith.constant 0 : i32
    %c0_i32_1 = arith.constant 0 : i32
    return %c0_i32, %c0_i32_0 : i32, i32
  }
  func.func @transform_1(%arg0: i32) -> (i32, i32) {
    %c0_i32 = arith.constant 0 : i32
    %c0_i32_0 = arith.constant 0 : i32
    %c0_i32_1 = arith.constant 0 : i32
    return %c0_i32, %c0_i32_0 : i32, i32
  }
  func.func @transform_2(%arg0: i32) -> (i32, i32) {
    %c0_i32 = arith.constant 0 : i32
    %c0_i32_0 = arith.constant 0 : i32
    %c0_i32_1 = arith.constant 0 : i32
    return %c0_i32, %c0_i32_0 : i32, i32
  }
  func.func @transform_3(%arg0: i32) -> (i32, i32, i32) {
    %c0_i32 = arith.constant 0 : i32
    %c0_i32_0 = arith.constant 0 : i32
    %c0_i32_1 = arith.constant 0 : i32
    %c0_i32_2 = arith.constant 0 : i32
    return %c0_i32, %c0_i32_0, %c0_i32_1 : i32, i32, i32
  }
  func.func @transform_4(%arg0: i32) -> (i32, i32) {
    %c0_i32 = arith.constant 0 : i32
    %c0_i32_0 = arith.constant 0 : i32
    %c0_i32_1 = arith.constant 0 : i32
    return %c0_i32, %c0_i32_0 : i32, i32
  }
  func.func @transform_5(%arg0: i32) -> (i32, i32, i32) {
    %c0_i32 = arith.constant 0 : i32
    %c0_i32_0 = arith.constant 0 : i32
    %c0_i32_1 = arith.constant 0 : i32
    %c0_i32_2 = arith.constant 0 : i32
    return %c0_i32, %c0_i32_0, %c0_i32_1 : i32, i32, i32
  }
}

</mosaic_0001>

<llo_original>
// kernel: mla_forward.1
$region0: #{mla_forward.1}
  #allocation0 [shape = 'u32[]', space=smem, size = 0x4, offset = 0x4, fixed_abs, tag = 'smem constant byte address 0x4 - core index']
  #allocation1 [shape = 'u32[144,128]{1,0:T(1,128)}', space=vmem, size = 0x12000, scoped, tag = 'internal scratch']
  %s0 = inlined_call_operand.vmem [shape: f32[16,32], index: 0, kind: input, shape index: {}]
  %s1 = inlined_call_operand.hbm [shape: f32[32,96], index: 1, kind: input, shape index: {}]
  %s2 = inlined_call_operand.vmem [shape: f32[1,96], index: 2, kind: input, shape index: {}]
  %s3 = inlined_call_operand.hbm [shape: f32[4,8,32], index: 3, kind: input, shape index: {}]
  %s4 = inlined_call_operand.vmem [shape: f32[1,32], index: 4, kind: input, shape index: {}]
  %s5 = inlined_call_operand.hbm [shape: f32[2,8,32], index: 5, kind: output, shape index: {}]
  %s6 = sld [smem:[#allocation0]]
  $region38: #{mla_forward.1} parent=0
    _
  %s8 = ssub.s32 1, %s6
  %s9 = scalar_select 0, %s8, %s6
  $region1: #{mla_forward.1} parent=0
    #allocation2 [shape = 'u8[16384]{0}', space=vmem, size = 0x4000, scoped, tag = 'input window, operand 1, single buffered']
    #allocation3 [shape = 's32[1]{0}', space=sflag, size = 0x4, scoped, tag = 'scoped memory for mla_forward.1']
    #allocation4 [shape = 's32[1]{0}', space=sflag, size = 0x4, scoped, tag = 'scoped memory for mla_forward.1']
    #allocation5 [shape = 'u8[16384]{0}', space=vmem, size = 0x4000, scoped, tag = 'input window, operand 3, single buffered']
    #allocation6 [shape = 's32[1]{0}', space=sflag, size = 0x4, scoped, tag = 'scoped memory for mla_forward.1']
    #allocation7 [shape = 'u8[8192]{0}', space=vmem, size = 0x2000, scoped, tag = 'output window, operand 0, single buffered']
    %10 = vsyncpa [#allocation3], 0
    %11 = vsyncpa [#allocation6], 0
    %12 = vsyncpa [#allocation4], 0
    // Predicated region
    $region2: #{mla_forward.1} parent=1 // pred_check
      _
    $region3: #{mla_forward.1} parent=1 // pred_check_branch
      %14 = sbr.rel (0) target = $region5
    $region4: #{mla_forward.1} parent=1 // pred_region
      _
    $region5: #{mla_forward.1} parent=1 // pred_fallthru
      _
    // Predicated region
    $region6: #{mla_forward.1} parent=1 // pred_check
      _
    $region7: #{mla_forward.1} parent=1 // pred_check_branch
      %16 = sbr.rel (0) target = $region9
    $region8: #{mla_forward.1} parent=1 // pred_region
      %s18 = ssub.s32 512, 512
      %19 = vsyncadd [#allocation3], %s18
      %s20 = sshll.u32 [#allocation2], 4
      %s21 = int_to_ptr.vmem [resolvable:$true] %s20
      %26 = dma.hbm_to_vmem [thread:$0]  %s1, 512, %s21, [#allocation3], 128, 128, 8
    $region9: #{mla_forward.1} parent=1 // pred_fallthru
      _
    // Predicated region
    $region10: #{mla_forward.1} parent=1 // pred_check
      _
    $region11: #{mla_forward.1} parent=1 // pred_check_branch
      %28 = sbr.rel (0) target = $region13
    $region12: #{mla_forward.1} parent=1 // pred_region
      _
    $region13: #{mla_forward.1} parent=1 // pred_fallthru
      _
    // Predicated region
    $region14: #{mla_forward.1} parent=1 // pred_check
      _
    $region15: #{mla_forward.1} parent=1 // pred_check_branch
      %30 = sbr.rel (0) target = $region17
    $region16: #{mla_forward.1} parent=1 // pred_region
      %s32 = ssub.s32 512, 512
      %33 = vsyncadd [#allocation6], %s32
      %s34 = sshll.u32 [#allocation5], 4
      %s35 = int_to_ptr.vmem [resolvable:$true] %s34
      %40 = dma.hbm_to_vmem [thread:$0]  %s3, 512, %s35, [#allocation6], 128, 128, 8
    $region17: #{mla_forward.1} parent=1 // pred_fallthru
      _
    // Predicated region
    $region18: #{mla_forward.1} parent=1 // pred_check
      _
    $region19: #{mla_forward.1} parent=1 // pred_check_branch
      %42 = sbr.rel (0) target = $region21
    $region20: #{mla_forward.1} parent=1 // pred_region
      _
    $region21: #{mla_forward.1} parent=1 // pred_fallthru
      _
    // Predicated region
    $region22: #{mla_forward.1} parent=1 // pred_check
      _
    $region23: #{mla_forward.1} parent=1 // pred_check_branch
      %44 = sbr.rel (0) target = $region25
    $region24: #{mla_forward.1} parent=1 // pred_region
      %45 = dma.done [#allocation3], 512
    $region25: #{mla_forward.1} parent=1 // pred_fallthru
      _
    // Predicated region
    $region26: #{mla_forward.1} parent=1 // pred_check
      _
    $region27: #{mla_forward.1} parent=1 // pred_check_branch
      %47 = sbr.rel (0) target = $region29
    $region28: #{mla_forward.1} parent=1 // pred_region
      %48 = dma.done [#allocation6], 512
    $region29: #{mla_forward.1} parent=1 // pred_fallthru
      _
    %v49 = vld [vmem:[%s0] sm:$0xff]
    %v50 = vld [vmem:[%s0 + $0x8] sm:$0xff]
    %v51 = vld [vmem:[#allocation2] sm:$0xff]
    %v52 = vld [vmem:[#allocation2 + $0x8] sm:$0xff]
    %v53 = vld [vmem:[#allocation2 + $0x10] sm:$0xff]
    %v54 = vld [vmem:[#allocation2 + $0x18] sm:$0xff]
    %v55 = vld [vmem:[%s2] sm:$0x1]
    %v57 = vlaneseq
    %v58 = vshrl.u32 %v57, 7
    %v59 = vsub.s32 0, %v58
    %v60 = vrot.slane %v55, %v59
    %vm62 = vcmask 261120
    %v64 = vsel %vm62, %v49, 0
    %v67 = vsel %vm62, %v50, 0
    %69 = vmatprep.subr.mxu0 0.0
    %70 = vmatpush1.msra.mxu0 %v51
    %71 = vmatprep.subr.mxu0 0.0
    %72 = vmatpush1.msra.mxu0 %v52
    %73 = vmatprep.subr.mxu0 0.0
    %74 = vmatpush1.msra.mxu0 %v53
    %75 = vmatprep.subr.mxu0 0.0
    %76 = vmatpush1.msra.mxu0 %v54
    %77 = vmatprep.subr.mxu0 0.0
    %78 = vmatpush1.msra.mxu0 0.0
    %79 = vmatprep.subr.mxu0 0.0
    %80 = vmatpush1.msra.mxu0 0.0
    %81 = vmatprep.subr.mxu0 0.0
    %82 = vmatpush1.msra.mxu0 0.0
    %83 = vmatprep.subr.mxu0 0.0
    %84 = vmatpush1.msra.mxu0 0.0
    %85 = vmatprep.subr.mxu0 0.0
    %86 = vmatpush1.msra.mxu0 0.0
    %87 = vmatprep.subr.mxu0 0.0
    %88 = vmatpush1.msra.mxu0 0.0
    %89 = vmatprep.subr.mxu0 0.0
    %90 = vmatpush1.msra.mxu0 0.0
    %91 = vmatprep.subr.mxu0 0.0
    %92 = vmatpush1.msra.mxu0 0.0
    %93 = vmatprep.subr.mxu0 0.0
    %94 = vmatpush1.msra.mxu0 0.0
    %95 = vmatprep.subr.mxu0 0.0
    %96 = vmatpush1.msra.mxu0 0.0
    %97 = vmatprep.subr.mxu0 0.0
    %98 = vmatpush1.msra.mxu0 0.0
    %99 = vmatprep.subr.mxu0 0.0
    %100 = vmatpush1.msra.mxu0 0.0
    %101 = vmatprep.subr.mxu0 0.0
    %102 = vmatpush1.msra.mxu0 0.0
    %103 = vmatprep.subr.mxu0 0.0
    %104 = vmatpush1.msra.mxu0 0.0
    %105 = vmatprep.subr.mxu0 0.0
    %106 = vmatpush1.msra.mxu0 0.0
    %107 = vmatprep.subr.mxu0 0.0
    %108 = vmatpush1.msra.mxu0 0.0
    %109 = vmatprep.subr.mxu0 0.0
    %110 = vmatpush1.msra.mxu0 0.0
    %111 = vmatprep.subr.mxu0 0.0
    %112 = vmatpush1.msra.mxu0 0.0
    %113 = vmatprep.subr.mxu0 0.0
    %114 = vmatpush1.msra.mxu0 0.0
    %115 = vmatprep.subr.mxu0 0.0
    %116 = vmatpush1.msra.mxu0 0.0
    %117 = vmatprep.subr.mxu0 0.0
    %118 = vmatpush1.msra.mxu0 0.0
    %119 = vmatprep.subr.mxu0 0.0
    %120 = vmatpush1.msra.mxu0 0.0
    %121 = vmatprep.subr.mxu0 0.0
    %122 = vmatpush1.msra.mxu0 0.0
    %123 = vmatprep.subr.mxu0 0.0
    %124 = vmatpush1.msra.mxu0 0.0
    %125 = vmatprep.subr.mxu0 0.0
    %126 = vmatpush1.msra.mxu0 0.0
    %127 = vmatprep.subr.mxu0 0.0
    %128 = vmatpush1.msra.mxu0 0.0
    %129 = vmatprep.subr.mxu0 0.0
    %130 = vmatpush1.msra.mxu0 0.0
    %131 = vmatprep.subr.mxu0 0.0
    %132 = vmatpush1.msra.mxu0 0.0
    %133 = vmatprep.mubr.f32.mxu0 0.0
    %134 = vmatmul.mubr.f32.gmra.mrb[0].mxu0 %v64
    %v135 = vpop.f32.mrb[0].mxu0
    %v136 = vadd.f32 %v60, %v135
    %v137 = vpop.f32.mrb[0].mxu0
    %138 = vmatprep.mubr.f32.mxu0 0.0
    %139 = vmatmul.mubr.f32.gmra.mrb[0].mxu0 %v67
    %v140 = vpop.f32.mrb[0].mxu0
    %v141 = vadd.f32 %v60, %v140
    %v142 = vpop.f32.mrb[0].mxu0
    %143 = vdwg.mxu0
    %v144 = vld [vmem:[%s4] sm:$0x1]
    %146 = vrot.lane.b32.xlu0 %v136, 96
    %v147 = vpop.permute.xlu0 %146
    %vm148 = vcmask 64512
    %v149 = vsel %vm148, %v136, 0
    %v151 = vsel %vm148, %v147, 0
    %153 = vmatprep.subr.mxu0 0.0
    %154 = vmatpush1.xpose.msra.mxu0 %v151
    %155 = vmatprep.subr.mxu0 0.0
    %156 = vmatpush1.xpose.msra.mxu0 0.0
    %157 = vmatprep.subr.mxu0 0.0
    %158 = vmatpush1.xpose.msra.mxu0 0.0
    %159 = vmatprep.subr.mxu0 0.0
    %160 = vmatpush1.xpose.msra.mxu0 0.0
    %161 = vmatprep.subr.mxu0 0.0
    %162 = vmatpush1.xpose.msra.mxu0 0.0
    %163 = vmatprep.subr.mxu0 0.0
    %164 = vmatpush1.xpose.msra.mxu0 0.0
    %165 = vmatprep.subr.mxu0 0.0
    %166 = vmatpush1.xpose.msra.mxu0 0.0
    %167 = vmatprep.subr.mxu0 0.0
    %168 = vmatpush1.xpose.msra.mxu0 0.0
    %169 = vmatprep.subr.mxu0 0.0
    %170 = vmatpush1.xpose.msra.mxu0 0.0
    %171 = vmatprep.subr.mxu0 0.0
    %172 = vmatpush1.xpose.msra.mxu0 0.0
    %173 = vmatprep.subr.mxu0 0.0
    %174 = vmatpush1.xpose.msra.mxu0 0.0
    %175 = vmatprep.subr.mxu0 0.0
    %176 = vmatpush1.xpose.msra.mxu0 0.0
    %177 = vmatprep.subr.mxu0 0.0
    %178 = vmatpush1.xpose.msra.mxu0 0.0
    %179 = vmatprep.subr.mxu0 0.0
    %180 = vmatpush1.xpose.msra.mxu0 0.0
    %181 = vmatprep.subr.mxu0 0.0
    %182 = vmatpush1.xpose.msra.mxu0 0.0
    %183 = vmatprep.subr.mxu0 0.0
    %184 = vmatpush1.xpose.msra.mxu0 0.0
    %185 = vmatprep.subr.mxu0 0.0
    %186 = vmatpush1.xpose.msra.mxu0 0.0
    %187 = vmatprep.subr.mxu0 0.0
    %188 = vmatpush1.xpose.msra.mxu0 0.0
    %189 = vmatprep.subr.mxu0 0.0
    %190 = vmatpush1.xpose.msra.mxu0 0.0
    %191 = vmatprep.subr.mxu0 0.0
    %192 = vmatpush1.xpose.msra.mxu0 0.0
    %193 = vmatprep.subr.mxu0 0.0
    %194 = vmatpush1.xpose.msra.mxu0 0.0
    %195 = vmatprep.subr.mxu0 0.0
    %196 = vmatpush1.xpose.msra.mxu0 0.0
    %197 = vmatprep.subr.mxu0 0.0
    %198 = vmatpush1.xpose.msra.mxu0 0.0
    %199 = vmatprep.subr.mxu0 0.0
    %200 = vmatpush1.xpose.msra.mxu0 0.0
    %201 = vmatprep.subr.mxu0 0.0
    %202 = vmatpush1.xpose.msra.mxu0 0.0
    %203 = vmatprep.subr.mxu0 0.0
    %204 = vmatpush1.xpose.msra.mxu0 0.0
    %205 = vmatprep.subr.mxu0 0.0
    %206 = vmatpush1.xpose.msra.mxu0 0.0
    %207 = vmatprep.subr.mxu0 0.0
    %208 = vmatpush1.xpose.msra.mxu0 0.0
    %209 = vmatprep.subr.mxu0 0.0
    %210 = vmatpush1.xpose.msra.mxu0 0.0
    %211 = vmatprep.subr.mxu0 0.0
    %212 = vmatpush1.xpose.msra.mxu0 0.0
    %213 = vmatprep.subr.mxu0 0.0
    %214 = vmatpush1.xpose.msra.mxu0 0.0
    %215 = vmatprep.subr.mxu0 0.0
    %216 = vmatpush1.xpose.msra.mxu0 0.0
    %217 = vmatprep.mubr.f32.mxu0 0.0
    %218 = vmatmul.mubr.f32.gmra.mrb[0].mxu0 %v149
    %v219 = vpop.f32.mrb[0].mxu0
    %v220 = vadd.f32 0.0, %v219
    %v221 = vpop.f32.mrb[0].mxu0
    %222 = vdwg.mxu0
    %v223 = vsel %vm148, %v220, -inf
    %224 = vmax.xlane.f32.xlu0 %v223
    %v225 = vpop.xlane.xlu0 %224
    %v226 = vsub.f32 %v220, %v225
    %v227 = vmul.f32 %v226, 1.442695
    %v228 = vpow.pop %v227
    %v229 = vsel %vm148, %v228, 0.0
    %230 = vadd.xlane.f32.xlu0 %v229
    %v231 = vpop.xlane.xlu0 %230
    %v232 = vrcp.pop %v231
    %v233 = vmul.f32 %v228, %v232
    %234 = vrot.lane.b32.xlu0 %v136, 64
    %v235 = vpop.permute.xlu0 %234
    %v238 = vsel %vm148, %v233, 0
    %240 = vmatprep.subr.mxu0 0.0
    %241 = vmatpush1.msra.mxu0 %v235
    %242 = vmatprep.subr.mxu0 0.0
    %243 = vmatpush1.msra.mxu0 0.0
    %244 = vmatprep.subr.mxu0 0.0
    %245 = vmatpush1.msra.mxu0 0.0
    %246 = vmatprep.subr.mxu0 0.0
    %247 = vmatpush1.msra.mxu0 0.0
    %248 = vmatprep.subr.mxu0 0.0
    %249 = vmatpush1.msra.mxu0 0.0
    %250 = vmatprep.subr.mxu0 0.0
    %251 = vmatpush1.msra.mxu0 0.0
    %252 = vmatprep.subr.mxu0 0.0
    %253 = vmatpush1.msra.mxu0 0.0
    %254 = vmatprep.subr.mxu0 0.0
    %255 = vmatpush1.msra.mxu0 0.0
    %256 = vmatprep.subr.mxu0 0.0
    %257 = vmatpush1.msra.mxu0 0.0
    %258 = vmatprep.subr.mxu0 0.0
    %259 = vmatpush1.msra.mxu0 0.0
    %260 = vmatprep.subr.mxu0 0.0
    %261 = vmatpush1.msra.mxu0 0.0
    %262 = vmatprep.subr.mxu0 0.0
    %263 = vmatpush1.msra.mxu0 0.0
    %264 = vmatprep.subr.mxu0 0.0
    %265 = vmatpush1.msra.mxu0 0.0
    %266 = vmatprep.subr.mxu0 0.0
    %267 = vmatpush1.msra.mxu0 0.0
    %268 = vmatprep.subr.mxu0 0.0
    %269 = vmatpush1.msra.mxu0 0.0
    %270 = vmatprep.subr.mxu0 0.0
    %271 = vmatpush1.msra.mxu0 0.0
    %272 = vmatprep.subr.mxu0 0.0
    %273 = vmatpush1.msra.mxu0 0.0
    %274 = vmatprep.subr.mxu0 0.0
    %275 = vmatpush1.msra.mxu0 0.0
    %276 = vmatprep.subr.mxu0 0.0
    %277 = vmatpush1.msra.mxu0 0.0
    %278 = vmatprep.subr.mxu0 0.0
    %279 = vmatpush1.msra.mxu0 0.0
    %280 = vmatprep.subr.mxu0 0.0
    %281 = vmatpush1.msra.mxu0 0.0
    %282 = vmatprep.subr.mxu0 0.0
    %283 = vmatpush1.msra.mxu0 0.0
    %284 = vmatprep.subr.mxu0 0.0
    %285 = vmatpush1.msra.mxu0 0.0
    %286 = vmatprep.subr.mxu0 0.0
    %287 = vmatpush1.msra.mxu0 0.0
    %288 = vmatprep.subr.mxu0 0.0
    %289 = vmatpush1.msra.mxu0 0.0
    %290 = vmatprep.subr.mxu0 0.0
    %291 = vmatpush1.msra.mxu0 0.0
    %292 = vmatprep.subr.mxu0 0.0
    %293 = vmatpush1.msra.mxu0 0.0
    %294 = vmatprep.subr.mxu0 0.0
    %295 = vmatpush1.msra.mxu0 0.0
    %296 = vmatprep.subr.mxu0 0.0
    %297 = vmatpush1.msra.mxu0 0.0
    %298 = vmatprep.subr.mxu0 0.0
    %299 = vmatpush1.msra.mxu0 0.0
    %300 = vmatprep.subr.mxu0 0.0
    %301 = vmatpush1.msra.mxu0 0.0
    %302 = vmatprep.subr.mxu0 0.0
    %303 = vmatpush1.msra.mxu0 0.0
    %304 = vmatprep.mubr.f32.mxu0 0.0
    %305 = vmatmul.mubr.f32.gmra.mrb[0].mxu0 %v238
    %v306 = vpop.f32.mrb[0].mxu0
    %v307 = vadd.f32 0.0, %v306
    %v308 = vpop.f32.mrb[0].mxu0
    %309 = vdwg.mxu0
    %v310 = vld [vmem:[#allocation5] sm:$0xff]
    %311 = vrot.lane.b32.xlu0 %v136, 120
    %v312 = vpop.permute.xlu0 %311
    %313 = vrot.lane.b32.xlu0 %v136, 88
    %v314 = vpop.permute.xlu0 %313
    %v315 = vsel %vm148, %v312, 0
    %v317 = vsel %vm148, %v314, 0
    %319 = vmatprep.subr.mxu0 0.0
    %320 = vmatpush1.xpose.msra.mxu0 %v317
    %321 = vmatprep.subr.mxu0 0.0
    %322 = vmatpush1.xpose.msra.mxu0 0.0
    %323 = vmatprep.subr.mxu0 0.0
    %324 = vmatpush1.xpose.msra.mxu0 0.0
    %325 = vmatprep.subr.mxu0 0.0
    %326 = vmatpush1.xpose.msra.mxu0 0.0
    %327 = vmatprep.subr.mxu0 0.0
    %328 = vmatpush1.xpose.msra.mxu0 0.0
    %329 = vmatprep.subr.mxu0 0.0
    %330 = vmatpush1.xpose.msra.mxu0 0.0
    %331 = vmatprep.subr.mxu0 0.0
    %332 = vmatpush1.xpose.msra.mxu0 0.0
    %333 = vmatprep.subr.mxu0 0.0
    %334 = vmatpush1.xpose.msra.mxu0 0.0
    %335 = vmatprep.subr.mxu0 0.0
    %336 = vmatpush1.xpose.msra.mxu0 0.0
    %337 = vmatprep.subr.mxu0 0.0
    %338 = vmatpush1.xpose.msra.mxu0 0.0
    %339 = vmatprep.subr.mxu0 0.0
    %340 = vmatpush1.xpose.msra.mxu0 0.0
    %341 = vmatprep.subr.mxu0 0.0
    %342 = vmatpush1.xpose.msra.mxu0 0.0
    %343 = vmatprep.subr.mxu0 0.0
    %344 = vmatpush1.xpose.msra.mxu0 0.0
    %345 = vmatprep.subr.mxu0 0.0
    %346 = vmatpush1.xpose.msra.mxu0 0.0
    %347 = vmatprep.subr.mxu0 0.0
    %348 = vmatpush1.xpose.msra.mxu0 0.0
    %349 = vmatprep.subr.mxu0 0.0
    %350 = vmatpush1.xpose.msra.mxu0 0.0
    %351 = vmatprep.subr.mxu0 0.0
    %352 = vmatpush1.xpose.msra.mxu0 0.0
    %353 = vmatprep.subr.mxu0 0.0
    %354 = vmatpush1.xpose.msra.mxu0 0.0
    %355 = vmatprep.subr.mxu0 0.0
    %356 = vmatpush1.xpose.msra.mxu0 0.0
    %357 = vmatprep.subr.mxu0 0.0
    %358 = vmatpush1.xpose.msra.mxu0 0.0
    %359 = vmatprep.subr.mxu0 0.0
    %360 = vmatpush1.xpose.msra.mxu0 0.0
    %361 = vmatprep.subr.mxu0 0.0
    %362 = vmatpush1.xpose.msra.mxu0 0.0
    %363 = vmatprep.subr.mxu0 0.0
    %364 = vmatpush1.xpose.msra.mxu0 0.0
    %365 = vmatprep.subr.mxu0 0.0
    %366 = vmatpush1.xpose.msra.mxu0 0.0
    %367 = vmatprep.subr.mxu0 0.0
    %368 = vmatpush1.xpose.msra.mxu0 0.0
    %369 = vmatprep.subr.mxu0 0.0
    %370 = vmatpush1.xpose.msra.mxu0 0.0
    %371 = vmatprep.subr.mxu0 0.0
    %372 = vmatpush1.xpose.msra.mxu0 0.0
    %373 = vmatprep.subr.mxu0 0.0
    %374 = vmatpush1.xpose.msra.mxu0 0.0
    %375 = vmatprep.subr.mxu0 0.0
    %376 = vmatpush1.xpose.msra.mxu0 0.0
    %377 = vmatprep.subr.mxu0 0.0
    %378 = vmatpush1.xpose.msra.mxu0 0.0
    %379 = vmatprep.subr.mxu0 0.0
    %380 = vmatpush1.xpose.msra.mxu0 0.0
    %381 = vmatprep.subr.mxu0 0.0
    %382 = vmatpush1.xpose.msra.mxu0 0.0
    %383 = vmatprep.mubr.f32.mxu0 0.0
    %384 = vmatmul.mubr.f32.gmra.mrb[0].mxu0 %v315
    %v385 = vpop.f32.mrb[0].mxu0
    %v386 = vadd.f32 0.0, %v385
    %v387 = vpop.f32.mrb[0].mxu0
    %388 = vdwg.mxu0
    %v389 = vsel %vm148, %v386, -inf
    %390 = vmax.xlane.f32.xlu0 %v389
    %v391 = vpop.xlane.xlu0 %390
    %v392 = vsub.f32 %v386, %v391
    %v393 = vmul.f32 %v392, 1.442695
    %v394 = vpow.pop %v393
    %v395 = vsel %vm148, %v394, 0.0
    %396 = vadd.xlane.f32.xlu0 %v395
    %v397 = vpop.xlane.xlu0 %396
    %v398 = vrcp.pop %v397
    %v399 = vmul.f32 %v394, %v398
    %400 = vrot.lane.b32.xlu0 %v136, 56
    %v401 = vpop.permute.xlu0 %400
    %v404 = vsel %vm148, %v399, 0
    %406 = vmatprep.subr.mxu0 0.0
    %407 = vmatpush1.msra.mxu0 %v401
    %408 = vmatprep.subr.mxu0 0.0
    %409 = vmatpush1.msra.mxu0 0.0
    %410 = vmatprep.subr.mxu0 0.0
    %411 = vmatpush1.msra.mxu0 0.0
    %412 = vmatprep.subr.mxu0 0.0
    %413 = vmatpush1.msra.mxu0 0.0
    %414 = vmatprep.subr.mxu0 0.0
    %415 = vmatpush1.msra.mxu0 0.0
    %416 = vmatprep.subr.mxu0 0.0
    %417 = vmatpush1.msra.mxu0 0.0
    %418 = vmatprep.subr.mxu0 0.0
    %419 = vmatpush1.msra.mxu0 0.0
    %420 = vmatprep.subr.mxu0 0.0
    %421 = vmatpush1.msra.mxu0 0.0
    %422 = vmatprep.subr.mxu0 0.0
    %423 = vmatpush1.msra.mxu0 0.0
    %424 = vmatprep.subr.mxu0 0.0
    %425 = vmatpush1.msra.mxu0 0.0
    %426 = vmatprep.subr.mxu0 0.0
    %427 = vmatpush1.msra.mxu0 0.0
    %428 = vmatprep.subr.mxu0 0.0
    %429 = vmatpush1.msra.mxu0 0.0
    %430 = vmatprep.subr.mxu0 0.0
    %431 = vmatpush1.msra.mxu0 0.0
    %432 = vmatprep.subr.mxu0 0.0
    %433 = vmatpush1.msra.mxu0 0.0
    %434 = vmatprep.subr.mxu0 0.0
    %435 = vmatpush1.msra.mxu0 0.0
    %436 = vmatprep.subr.mxu0 0.0
    %437 = vmatpush1.msra.mxu0 0.0
    %438 = vmatprep.subr.mxu0 0.0
    %439 = vmatpush1.msra.mxu0 0.0
    %440 = vmatprep.subr.mxu0 0.0
    %441 = vmatpush1.msra.mxu0 0.0
    %442 = vmatprep.subr.mxu0 0.0
    %443 = vmatpush1.msra.mxu0 0.0
    %444 = vmatprep.subr.mxu0 0.0
    %445 = vmatpush1.msra.mxu0 0.0
    %446 = vmatprep.subr.mxu0 0.0
    %447 = vmatpush1.msra.mxu0 0.0
    %448 = vmatprep.subr.mxu0 0.0
    %449 = vmatpush1.msra.mxu0 0.0
    %450 = vmatprep.subr.mxu0 0.0
    %451 = vmatpush1.msra.mxu0 0.0
    %452 = vmatprep.subr.mxu0 0.0
    %453 = vmatpush1.msra.mxu0 0.0
    %454 = vmatprep.subr.mxu0 0.0
    %455 = vmatpush1.msra.mxu0 0.0
    %456 = vmatprep.subr.mxu0 0.0
    %457 = vmatpush1.msra.mxu0 0.0
    %458 = vmatprep.subr.mxu0 0.0
    %459 = vmatpush1.msra.mxu0 0.0
    %460 = vmatprep.subr.mxu0 0.0
    %461 = vmatpush1.msra.mxu0 0.0
    %462 = vmatprep.subr.mxu0 0.0
    %463 = vmatpush1.msra.mxu0 0.0
    %464 = vmatprep.subr.mxu0 0.0
    %465 = vmatpush1.msra.mxu0 0.0
    %466 = vmatprep.subr.mxu0 0.0
    %467 = vmatpush1.msra.mxu0 0.0
    %468 = vmatprep.subr.mxu0 0.0
    %469 = vmatpush1.msra.mxu0 0.0
    %470 = vmatprep.mubr.f32.mxu0 0.0
    %471 = vmatmul.mubr.f32.gmra.mrb[0].mxu0 %v404
    %v472 = vpop.f32.mrb[0].mxu0
    %v473 = vadd.f32 0.0, %v472
    %v474 = vpop.f32.mrb[0].mxu0
    %475 = vdwg.mxu0
    %s476 = scalar_lea.vmem [#allocation5], 8
    %v477 = vld [vmem:[%s476] sm:$0xff]
    %v479 = vsel %vm148, %v473, 0
    %481 = vmatprep.subr.mxu0 0.0
    %482 = vmatpush1.msra.mxu0 %v477
    %483 = vmatprep.subr.mxu0 0.0
    %484 = vmatpush1.msra.mxu0 0.0
    %485 = vmatprep.subr.mxu0 0.0
    %486 = vmatpush1.msra.mxu0 0.0
    %487 = vmatprep.subr.mxu0 0.0
    %488 = vmatpush1.msra.mxu0 0.0
    %489 = vmatprep.subr.mxu0 0.0
    %490 = vmatpush1.msra.mxu0 0.0
    %491 = vmatprep.subr.mxu0 0.0
    %492 = vmatpush1.msra.mxu0 0.0
    %493 = vmatprep.subr.mxu0 0.0
    %494 = vmatpush1.msra.mxu0 0.0
    %495 = vmatprep.subr.mxu0 0.0
    %496 = vmatpush1.msra.mxu0 0.0
    %497 = vmatprep.subr.mxu0 0.0
    %498 = vmatpush1.msra.mxu0 0.0
    %499 = vmatprep.subr.mxu0 0.0
    %500 = vmatpush1.msra.mxu0 0.0
    %501 = vmatprep.subr.mxu0 0.0
    %502 = vmatpush1.msra.mxu0 0.0
    %503 = vmatprep.subr.mxu0 0.0
    %504 = vmatpush1.msra.mxu0 0.0
    %505 = vmatprep.subr.mxu0 0.0
    %506 = vmatpush1.msra.mxu0 0.0
    %507 = vmatprep.subr.mxu0 0.0
    %508 = vmatpush1.msra.mxu0 0.0
    %509 = vmatprep.subr.mxu0 0.0
    %510 = vmatpush1.msra.mxu0 0.0
    %511 = vmatprep.subr.mxu0 0.0
    %512 = vmatpush1.msra.mxu0 0.0
    %513 = vmatprep.subr.mxu0 0.0
    %514 = vmatpush1.msra.mxu0 0.0
    %515 = vmatprep.subr.mxu0 0.0
    %516 = vmatpush1.msra.mxu0 0.0
    %517 = vmatprep.subr.mxu0 0.0
    %518 = vmatpush1.msra.mxu0 0.0
    %519 = vmatprep.subr.mxu0 0.0
    %520 = vmatpush1.msra.mxu0 0.0
    %521 = vmatprep.subr.mxu0 0.0
    %522 = vmatpush1.msra.mxu0 0.0
    %523 = vmatprep.subr.mxu0 0.0
    %524 = vmatpush1.msra.mxu0 0.0
    %525 = vmatprep.subr.mxu0 0.0
    %526 = vmatpush1.msra.mxu0 0.0
    %527 = vmatprep.subr.mxu0 0.0
    %528 = vmatpush1.msra.mxu0 0.0
    %529 = vmatprep.subr.mxu0 0.0
    %530 = vmatpush1.msra.mxu0 0.0
    %531 = vmatprep.subr.mxu0 0.0
    %532 = vmatpush1.msra.mxu0 0.0
    %533 = vmatprep.subr.mxu0 0.0
    %534 = vmatpush1.msra.mxu0 0.0
    %535 = vmatprep.subr.mxu0 0.0
    %536 = vmatpush1.msra.mxu0 0.0
    %537 = vmatprep.subr.mxu0 0.0
    %538 = vmatpush1.msra.mxu0 0.0
    %539 = vmatprep.subr.mxu0 0.0
    %540 = vmatpush1.msra.mxu0 0.0
    %541 = vmatprep.subr.mxu0 0.0
    %542 = vmatpush1.msra.mxu0 0.0
    %543 = vmatprep.subr.mxu0 0.0
    %544 = vmatpush1.msra.mxu0 0.0
    %545 = vmatprep.mubr.f32.mxu0 0.0
    %546 = vmatmul.mubr.f32.gmra.mrb[0].mxu0 %v479
    %v547 = vpop.f32.mrb[0].mxu0
    %v548 = vadd.f32 0.0, %v547
    %v549 = vpop.f32.mrb[0].mxu0
    %550 = vdwg.mxu0
    %v552 = vsel %vm148, %v307, 0
    %554 = vmatprep.subr.mxu0 0.0
    %555 = vmatpush1.msra.mxu0 %v310
    %556 = vmatprep.subr.mxu0 0.0
    %557 = vmatpush1.msra.mxu0 0.0
    %558 = vmatprep.subr.mxu0 0.0
    %559 = vmatpush1.msra.mxu0 0.0
    %560 = vmatprep.subr.mxu0 0.0
    %561 = vmatpush1.msra.mxu0 0.0
    %562 = vmatprep.subr.mxu0 0.0
    %563 = vmatpush1.msra.mxu0 0.0
    %564 = vmatprep.subr.mxu0 0.0
    %565 = vmatpush1.msra.mxu0 0.0
    %566 = vmatprep.subr.mxu0 0.0
    %567 = vmatpush1.msra.mxu0 0.0
    %568 = vmatprep.subr.mxu0 0.0
    %569 = vmatpush1.msra.mxu0 0.0
    %570 = vmatprep.subr.mxu0 0.0
    %571 = vmatpush1.msra.mxu0 0.0
    %572 = vmatprep.subr.mxu0 0.0
    %573 = vmatpush1.msra.mxu0 0.0
    %574 = vmatprep.subr.mxu0 0.0
    %575 = vmatpush1.msra.mxu0 0.0
    %576 = vmatprep.subr.mxu0 0.0
    %577 = vmatpush1.msra.mxu0 0.0
    %578 = vmatprep.subr.mxu0 0.0
    %579 = vmatpush1.msra.mxu0 0.0
    %580 = vmatprep.subr.mxu0 0.0
    %581 = vmatpush1.msra.mxu0 0.0
    %582 = vmatprep.subr.mxu0 0.0
    %583 = vmatpush1.msra.mxu0 0.0
    %584 = vmatprep.subr.mxu0 0.0
    %585 = vmatpush1.msra.mxu0 0.0
    %586 = vmatprep.subr.mxu0 0.0
    %587 = vmatpush1.msra.mxu0 0.0
    %588 = vmatprep.subr.mxu0 0.0
    %589 = vmatpush1.msra.mxu0 0.0
    %590 = vmatprep.subr.mxu0 0.0
    %591 = vmatpush1.msra.mxu0 0.0
    %592 = vmatprep.subr.mxu0 0.0
    %593 = vmatpush1.msra.mxu0 0.0
    %594 = vmatprep.subr.mxu0 0.0
    %595 = vmatpush1.msra.mxu0 0.0
    %596 = vmatprep.subr.mxu0 0.0
    %597 = vmatpush1.msra.mxu0 0.0
    %598 = vmatprep.subr.mxu0 0.0
    %599 = vmatpush1.msra.mxu0 0.0
    %600 = vmatprep.subr.mxu0 0.0
    %601 = vmatpush1.msra.mxu0 0.0
    %602 = vmatprep.subr.mxu0 0.0
    %603 = vmatpush1.msra.mxu0 0.0
    %604 = vmatprep.subr.mxu0 0.0
    %605 = vmatpush1.msra.mxu0 0.0
    %606 = vmatprep.subr.mxu0 0.0
    %607 = vmatpush1.msra.mxu0 0.0
    %608 = vmatprep.subr.mxu0 0.0
    %609 = vmatpush1.msra.mxu0 0.0
    %610 = vmatprep.subr.mxu0 0.0
    %611 = vmatpush1.msra.mxu0 0.0
    %612 = vmatprep.subr.mxu0 0.0
    %613 = vmatpush1.msra.mxu0 0.0
    %614 = vmatprep.subr.mxu0 0.0
    %615 = vmatpush1.msra.mxu0 0.0
    %616 = vmatprep.subr.mxu0 0.0
    %617 = vmatpush1.msra.mxu0 0.0
    %618 = vmatprep.mubr.f32.mxu0 0.0
    %619 = vmatmul.mubr.f32.gmra.mrb[0].mxu0 %v552
    %v620 = vpop.f32.mrb[0].mxu0
    %v621 = vadd.f32 %v548, %v620
    %v622 = vpop.f32.mrb[0].mxu0
    %623 = vdwg.mxu0
    %624 = vrot.lane.b32.xlu0 %v136, 112
    %v625 = vpop.permute.xlu0 %624
    %626 = vrot.lane.b32.xlu0 %v136, 80
    %v627 = vpop.permute.xlu0 %626
    %v628 = vsel %vm148, %v625, 0
    %v630 = vsel %vm148, %v627, 0
    %632 = vmatprep.subr.mxu0 0.0
    %633 = vmatpush1.xpose.msra.mxu0 %v630
    %634 = vmatprep.subr.mxu0 0.0
    %635 = vmatpush1.xpose.msra.mxu0 0.0
    %636 = vmatprep.subr.mxu0 0.0
    %637 = vmatpush1.xpose.msra.mxu0 0.0
    %638 = vmatprep.subr.mxu0 0.0
    %639 = vmatpush1.xpose.msra.mxu0 0.0
    %640 = vmatprep.subr.mxu0 0.0
    %641 = vmatpush1.xpose.msra.mxu0 0.0
    %642 = vmatprep.subr.mxu0 0.0
    %643 = vmatpush1.xpose.msra.mxu0 0.0
    %644 = vmatprep.subr.mxu0 0.0
    %645 = vmatpush1.xpose.msra.mxu0 0.0
    %646 = vmatprep.subr.mxu0 0.0
    %647 = vmatpush1.xpose.msra.mxu0 0.0
    %648 = vmatprep.subr.mxu0 0.0
    %649 = vmatpush1.xpose.msra.mxu0 0.0
    %650 = vmatprep.subr.mxu0 0.0
    %651 = vmatpush1.xpose.msra.mxu0 0.0
    %652 = vmatprep.subr.mxu0 0.0
    %653 = vmatpush1.xpose.msra.mxu0 0.0
    %654 = vmatprep.subr.mxu0 0.0
    %655 = vmatpush1.xpose.msra.mxu0 0.0
    %656 = vmatprep.subr.mxu0 0.0
    %657 = vmatpush1.xpose.msra.mxu0 0.0
    %658 = vmatprep.subr.mxu0 0.0
    %659 = vmatpush1.xpose.msra.mxu0 0.0
    %660 = vmatprep.subr.mxu0 0.0
    %661 = vmatpush1.xpose.msra.mxu0 0.0
    %662 = vmatprep.subr.mxu0 0.0
    %663 = vmatpush1.xpose.msra.mxu0 0.0
    %664 = vmatprep.subr.mxu0 0.0
    %665 = vmatpush1.xpose.msra.mxu0 0.0
    %666 = vmatprep.subr.mxu0 0.0
    %667 = vmatpush1.xpose.msra.mxu0 0.0
    %668 = vmatprep.subr.mxu0 0.0
    %669 = vmatpush1.xpose.msra.mxu0 0.0
    %670 = vmatprep.subr.mxu0 0.0
    %671 = vmatpush1.xpose.msra.mxu0 0.0
    %672 = vmatprep.subr.mxu0 0.0
    %673 = vmatpush1.xpose.msra.mxu0 0.0
    %674 = vmatprep.subr.mxu0 0.0
    %675 = vmatpush1.xpose.msra.mxu0 0.0
    %676 = vmatprep.subr.mxu0 0.0
    %677 = vmatpush1.xpose.msra.mxu0 0.0
    %678 = vmatprep.subr.mxu0 0.0
    %679 = vmatpush1.xpose.msra.mxu0 0.0
    %680 = vmatprep.subr.mxu0 0.0
    %681 = vmatpush1.xpose.msra.mxu0 0.0
    %682 = vmatprep.subr.mxu0 0.0
    %683 = vmatpush1.xpose.msra.mxu0 0.0
    %684 = vmatprep.subr.mxu0 0.0
    %685 = vmatpush1.xpose.msra.mxu0 0.0
    %686 = vmatprep.subr.mxu0 0.0
    %687 = vmatpush1.xpose.msra.mxu0 0.0
    %688 = vmatprep.subr.mxu0 0.0
    %689 = vmatpush1.xpose.msra.mxu0 0.0
    %690 = vmatprep.subr.mxu0 0.0
    %691 = vmatpush1.xpose.msra.mxu0 0.0
    %692 = vmatprep.subr.mxu0 0.0
    %693 = vmatpush1.xpose.msra.mxu0 0.0
    %694 = vmatprep.subr.mxu0 0.0
    %695 = vmatpush1.xpose.msra.mxu0 0.0
    %696 = vmatprep.mubr.f32.mxu0 0.0
    %697 = vmatmul.mubr.f32.gmra.mrb[0].mxu0 %v628
    %v698 = vpop.f32.mrb[0].mxu0
    %v699 = vadd.f32 0.0, %v698
    %v700 = vpop.f32.mrb[0].mxu0
    %701 = vdwg.mxu0
    %v702 = vsel %vm148, %v699, -inf
    %703 = vmax.xlane.f32.xlu0 %v702
    %v704 = vpop.xlane.xlu0 %703
    %v705 = vsub.f32 %v699, %v704
    %v706 = vmul.f32 %v705, 1.442695
    %v707 = vpow.pop %v706
    %v708 = vsel %vm148, %v707, 0.0
    %709 = vadd.xlane.f32.xlu0 %v708
    %v710 = vpop.xlane.xlu0 %709
    %v711 = vrcp.pop %v710
    %v712 = vmul.f32 %v707, %v711
    %713 = vrot.lane.b32.xlu0 %v136, 48
    %v714 = vpop.permute.xlu0 %713
    %v717 = vsel %vm148, %v712, 0
    %719 = vmatprep.subr.mxu0 0.0
    %720 = vmatpush1.msra.mxu0 %v714
    %721 = vmatprep.subr.mxu0 0.0
    %722 = vmatpush1.msra.mxu0 0.0
    %723 = vmatprep.subr.mxu0 0.0
    %724 = vmatpush1.msra.mxu0 0.0
    %725 = vmatprep.subr.mxu0 0.0
    %726 = vmatpush1.msra.mxu0 0.0
    %727 = vmatprep.subr.mxu0 0.0
    %728 = vmatpush1.msra.mxu0 0.0
    %729 = vmatprep.subr.mxu0 0.0
    %730 = vmatpush1.msra.mxu0 0.0
    %731 = vmatprep.subr.mxu0 0.0
    %732 = vmatpush1.msra.mxu0 0.0
    %733 = vmatprep.subr.mxu0 0.0
    %734 = vmatpush1.msra.mxu0 0.0
    %735 = vmatprep.subr.mxu0 0.0
    %736 = vmatpush1.msra.mxu0 0.0
    %737 = vmatprep.subr.mxu0 0.0
    %738 = vmatpush1.msra.mxu0 0.0
    %739 = vmatprep.subr.mxu0 0.0
    %740 = vmatpush1.msra.mxu0 0.0
    %741 = vmatprep.subr.mxu0 0.0
    %742 = vmatpush1.msra.mxu0 0.0
    %743 = vmatprep.subr.mxu0 0.0
    %744 = vmatpush1.msra.mxu0 0.0
    %745 = vmatprep.subr.mxu0 0.0
    %746 = vmatpush1.msra.mxu0 0.0
    %747 = vmatprep.subr.mxu0 0.0
    %748 = vmatpush1.msra.mxu0 0.0
    %749 = vmatprep.subr.mxu0 0.0
    %750 = vmatpush1.msra.mxu0 0.0
    %751 = vmatprep.subr.mxu0 0.0
    %752 = vmatpush1.msra.mxu0 0.0
    %753 = vmatprep.subr.mxu0 0.0
    %754 = vmatpush1.msra.mxu0 0.0
    %755 = vmatprep.subr.mxu0 0.0
    %756 = vmatpush1.msra.mxu0 0.0
    %757 = vmatprep.subr.mxu0 0.0
    %758 = vmatpush1.msra.mxu0 0.0
    %759 = vmatprep.subr.mxu0 0.0
    %760 = vmatpush1.msra.mxu0 0.0
    %761 = vmatprep.subr.mxu0 0.0
    %762 = vmatpush1.msra.mxu0 0.0
    %763 = vmatprep.subr.mxu0 0.0
    %764 = vmatpush1.msra.mxu0 0.0
    %765 = vmatprep.subr.mxu0 0.0
    %766 = vmatpush1.msra.mxu0 0.0
    %767 = vmatprep.subr.mxu0 0.0
    %768 = vmatpush1.msra.mxu0 0.0
    %769 = vmatprep.subr.mxu0 0.0
    %770 = vmatpush1.msra.mxu0 0.0
    %771 = vmatprep.subr.mxu0 0.0
    %772 = vmatpush1.msra.mxu0 0.0
    %773 = vmatprep.subr.mxu0 0.0
    %774 = vmatpush1.msra.mxu0 0.0
    %775 = vmatprep.subr.mxu0 0.0
    %776 = vmatpush1.msra.mxu0 0.0
    %777 = vmatprep.subr.mxu0 0.0
    %778 = vmatpush1.msra.mxu0 0.0
    %779 = vmatprep.subr.mxu0 0.0
    %780 = vmatpush1.msra.mxu0 0.0
    %781 = vmatprep.subr.mxu0 0.0
    %782 = vmatpush1.msra.mxu0 0.0
    %783 = vmatprep.mubr.f32.mxu0 0.0
    %784 = vmatmul.mubr.f32.gmra.mrb[0].mxu0 %v717
    %v785 = vpop.f32.mrb[0].mxu0
    %v786 = vadd.f32 0.0, %v785
    %v787 = vpop.f32.mrb[0].mxu0
    %788 = vdwg.mxu0
    %s789 = scalar_lea.vmem [#allocation5], 16
    %v790 = vld [vmem:[%s789] sm:$0xff]
    %v792 = vsel %vm148, %v786, 0
    %794 = vmatprep.subr.mxu0 0.0
    %795 = vmatpush1.msra.mxu0 %v790
    %796 = vmatprep.subr.mxu0 0.0
    %797 = vmatpush1.msra.mxu0 0.0
    %798 = vmatprep.subr.mxu0 0.0
    %799 = vmatpush1.msra.mxu0 0.0
    %800 = vmatprep.subr.mxu0 0.0
    %801 = vmatpush1.msra.mxu0 0.0
    %802 = vmatprep.subr.mxu0 0.0
    %803 = vmatpush1.msra.mxu0 0.0
    %804 = vmatprep.subr.mxu0 0.0
    %805 = vmatpush1.msra.mxu0 0.0
    %806 = vmatprep.subr.mxu0 0.0
    %807 = vmatpush1.msra.mxu0 0.0
    %808 = vmatprep.subr.mxu0 0.0
    %809 = vmatpush1.msra.mxu0 0.0
    %810 = vmatprep.subr.mxu0 0.0
    %811 = vmatpush1.msra.mxu0 0.0
    %812 = vmatprep.subr.mxu0 0.0
    %813 = vmatpush1.msra.mxu0 0.0
    %814 = vmatprep.subr.mxu0 0.0
    %815 = vmatpush1.msra.mxu0 0.0
    %816 = vmatprep.subr.mxu0 0.0
    %817 = vmatpush1.msra.mxu0 0.0
    %818 = vmatprep.subr.mxu0 0.0
    %819 = vmatpush1.msra.mxu0 0.0
    %820 = vmatprep.subr.mxu0 0.0
    %821 = vmatpush1.msra.mxu0 0.0
    %822 = vmatprep.subr.mxu0 0.0
    %823 = vmatpush1.msra.mxu0 0.0
    %824 = vmatprep.subr.mxu0 0.0
    %825 = vmatpush1.msra.mxu0 0.0
    %826 = vmatprep.subr.mxu0 0.0
    %827 = vmatpush1.msra.mxu0 0.0
    %828 = vmatprep.subr.mxu0 0.0
    %829 = vmatpush1.msra.mxu0 0.0
    %830 = vmatprep.subr.mxu0 0.0
    %831 = vmatpush1.msra.mxu0 0.0
    %832 = vmatprep.subr.mxu0 0.0
    %833 = vmatpush1.msra.mxu0 0.0
    %834 = vmatprep.subr.mxu0 0.0
    %835 = vmatpush1.msra.mxu0 0.0
    %836 = vmatprep.subr.mxu0 0.0
    %837 = vmatpush1.msra.mxu0 0.0
    %838 = vmatprep.subr.mxu0 0.0
    %839 = vmatpush1.msra.mxu0 0.0
    %840 = vmatprep.subr.mxu0 0.0
    %841 = vmatpush1.msra.mxu0 0.0
    %842 = vmatprep.subr.mxu0 0.0
    %843 = vmatpush1.msra.mxu0 0.0
    %844 = vmatprep.subr.mxu0 0.0
    %845 = vmatpush1.msra.mxu0 0.0
    %846 = vmatprep.subr.mxu0 0.0
    %847 = vmatpush1.msra.mxu0 0.0
    %848 = vmatprep.subr.mxu0 0.0
    %849 = vmatpush1.msra.mxu0 0.0
    %850 = vmatprep.subr.mxu0 0.0
    %851 = vmatpush1.msra.mxu0 0.0
    %852 = vmatprep.subr.mxu0 0.0
    %853 = vmatpush1.msra.mxu0 0.0
    %854 = vmatprep.subr.mxu0 0.0
    %855 = vmatpush1.msra.mxu0 0.0
    %856 = vmatprep.subr.mxu0 0.0
    %857 = vmatpush1.msra.mxu0 0.0
    %858 = vmatprep.mubr.f32.mxu0 0.0
    %859 = vmatmul.mubr.f32.gmra.mrb[0].mxu0 %v792
    %v860 = vpop.f32.mrb[0].mxu0
    %v861 = vadd.f32 0.0, %v860
    %v862 = vpop.f32.mrb[0].mxu0
    %863 = vdwg.mxu0
    %v864 = vadd.f32 %v621, %v861
    %865 = vrot.lane.b32.xlu0 %v136, 104
    %v866 = vpop.permute.xlu0 %865
    %867 = vrot.lane.b32.xlu0 %v136, 72
    %v868 = vpop.permute.xlu0 %867
    %v869 = vsel %vm148, %v866, 0
    %v871 = vsel %vm148, %v868, 0
    %873 = vmatprep.subr.mxu0 0.0
    %874 = vmatpush1.xpose.msra.mxu0 %v871
    %875 = vmatprep.subr.mxu0 0.0
    %876 = vmatpush1.xpose.msra.mxu0 0.0
    %877 = vmatprep.subr.mxu0 0.0
    %878 = vmatpush1.xpose.msra.mxu0 0.0
    %879 = vmatprep.subr.mxu0 0.0
    %880 = vmatpush1.xpose.msra.mxu0 0.0
    %881 = vmatprep.subr.mxu0 0.0
    %882 = vmatpush1.xpose.msra.mxu0 0.0
    %883 = vmatprep.subr.mxu0 0.0
    %884 = vmatpush1.xpose.msra.mxu0 0.0
    %885 = vmatprep.subr.mxu0 0.0
    %886 = vmatpush1.xpose.msra.mxu0 0.0
    %887 = vmatprep.subr.mxu0 0.0
    %888 = vmatpush1.xpose.msra.mxu0 0.0
    %889 = vmatprep.subr.mxu0 0.0
    %890 = vmatpush1.xpose.msra.mxu0 0.0
    %891 = vmatprep.subr.mxu0 0.0
    %892 = vmatpush1.xpose.msra.mxu0 0.0
    %893 = vmatprep.subr.mxu0 0.0
    %894 = vmatpush1.xpose.msra.mxu0 0.0
    %895 = vmatprep.subr.mxu0 0.0
    %896 = vmatpush1.xpose.msra.mxu0 0.0
    %897 = vmatprep.subr.mxu0 0.0
    %898 = vmatpush1.xpose.msra.mxu0 0.0
    %899 = vmatprep.subr.mxu0 0.0
    %900 = vmatpush1.xpose.msra.mxu0 0.0
    %901 = vmatprep.subr.mxu0 0.0
    %902 = vmatpush1.xpose.msra.mxu0 0.0
    %903 = vmatprep.subr.mxu0 0.0
    %904 = vmatpush1.xpose.msra.mxu0 0.0
    %905 = vmatprep.subr.mxu0 0.0
    %906 = vmatpush1.xpose.msra.mxu0 0.0
    %907 = vmatprep.subr.mxu0 0.0
    %908 = vmatpush1.xpose.msra.mxu0 0.0
    %909 = vmatprep.subr.mxu0 0.0
    %910 = vmatpush1.xpose.msra.mxu0 0.0
    %911 = vmatprep.subr.mxu0 0.0
    %912 = vmatpush1.xpose.msra.mxu0 0.0
    %913 = vmatprep.subr.mxu0 0.0
    %914 = vmatpush1.xpose.msra.mxu0 0.0
    %915 = vmatprep.subr.mxu0 0.0
    %916 = vmatpush1.xpose.msra.mxu0 0.0
    %917 = vmatprep.subr.mxu0 0.0
    %918 = vmatpush1.xpose.msra.mxu0 0.0
    %919 = vmatprep.subr.mxu0 0.0
    %920 = vmatpush1.xpose.msra.mxu0 0.0
    %921 = vmatprep.subr.mxu0 0.0
    %922 = vmatpush1.xpose.msra.mxu0 0.0
    %923 = vmatprep.subr.mxu0 0.0
    %924 = vmatpush1.xpose.msra.mxu0 0.0
    %925 = vmatprep.subr.mxu0 0.0
    %926 = vmatpush1.xpose.msra.mxu0 0.0
    %927 = vmatprep.subr.mxu0 0.0
    %928 = vmatpush1.xpose.msra.mxu0 0.0
    %929 = vmatprep.subr.mxu0 0.0
    %930 = vmatpush1.xpose.msra.mxu0 0.0
    %931 = vmatprep.subr.mxu0 0.0
    %932 = vmatpush1.xpose.msra.mxu0 0.0
    %933 = vmatprep.subr.mxu0 0.0
    %934 = vmatpush1.xpose.msra.mxu0 0.0
    %935 = vmatprep.subr.mxu0 0.0
    %936 = vmatpush1.xpose.msra.mxu0 0.0
    %937 = vmatprep.mubr.f32.mxu0 0.0
    %938 = vmatmul.mubr.f32.gmra.mrb[0].mxu0 %v869
    %v939 = vpop.f32.mrb[0].mxu0
    %v940 = vadd.f32 0.0, %v939
    %v941 = vpop.f32.mrb[0].mxu0
    %942 = vdwg.mxu0
    %v943 = vsel %vm148, %v940, -inf
    %944 = vmax.xlane.f32.xlu0 %v943
    %v945 = vpop.xlane.xlu0 %944
    %v946 = vsub.f32 %v940, %v945
    %v947 = vmul.f32 %v946, 1.442695
    %v948 = vpow.pop %v947
    %v949 = vsel %vm148, %v948, 0.0
    %950 = vadd.xlane.f32.xlu0 %v949
    %v951 = vpop.xlane.xlu0 %950
    %v952 = vrcp.pop %v951
    %v953 = vmul.f32 %v948, %v952
    %954 = vrot.lane.b32.xlu0 %v136, 40
    %v955 = vpop.permute.xlu0 %954
    %v958 = vsel %vm148, %v953, 0
    %960 = vmatprep.subr.mxu0 0.0
    %961 = vmatpush1.msra.mxu0 %v955
    %962 = vmatprep.subr.mxu0 0.0
    %963 = vmatpush1.msra.mxu0 0.0
    %964 = vmatprep.subr.mxu0 0.0
    %965 = vmatpush1.msra.mxu0 0.0
    %966 = vmatprep.subr.mxu0 0.0
    %967 = vmatpush1.msra.mxu0 0.0
    %968 = vmatprep.subr.mxu0 0.0
    %969 = vmatpush1.msra.mxu0 0.0
    %970 = vmatprep.subr.mxu0 0.0
    %971 = vmatpush1.msra.mxu0 0.0
    %972 = vmatprep.subr.mxu0 0.0
    %973 = vmatpush1.msra.mxu0 0.0
    %974 = vmatprep.subr.mxu0 0.0
    %975 = vmatpush1.msra.mxu0 0.0
    %976 = vmatprep.subr.mxu0 0.0
    %977 = vmatpush1.msra.mxu0 0.0
    %978 = vmatprep.subr.mxu0 0.0
    %979 = vmatpush1.msra.mxu0 0.0
    %980 = vmatprep.subr.mxu0 0.0
    %981 = vmatpush1.msra.mxu0 0.0
    %982 = vmatprep.subr.mxu0 0.0
    %983 = vmatpush1.msra.mxu0 0.0
    %984 = vmatprep.subr.mxu0 0.0
    %985 = vmatpush1.msra.mxu0 0.0
    %986 = vmatprep.subr.mxu0 0.0
    %987 = vmatpush1.msra.mxu0 0.0
    %988 = vmatprep.subr.mxu0 0.0
    %989 = vmatpush1.msra.mxu0 0.0
    %990 = vmatprep.subr.mxu0 0.0
    %991 = vmatpush1.msra.mxu0 0.0
    %992 = vmatprep.subr.mxu0 0.0
    %993 = vmatpush1.msra.mxu0 0.0
    %994 = vmatprep.subr.mxu0 0.0
    %995 = vmatpush1.msra.mxu0 0.0
    %996 = vmatprep.subr.mxu0 0.0
    %997 = vmatpush1.msra.mxu0 0.0
    %998 = vmatprep.subr.mxu0 0.0
    %999 = vmatpush1.msra.mxu0 0.0
    %1000 = vmatprep.subr.mxu0 0.0
    %1001 = vmatpush1.msra.mxu0 0.0
    %1002 = vmatprep.subr.mxu0 0.0
    %1003 = vmatpush1.msra.mxu0 0.0
    %1004 = vmatprep.subr.mxu0 0.0
    %1005 = vmatpush1.msra.mxu0 0.0
    %1006 = vmatprep.subr.mxu0 0.0
    %1007 = vmatpush1.msra.mxu0 0.0
    %1008 = vmatprep.subr.mxu0 0.0
    %1009 = vmatpush1.msra.mxu0 0.0
    %1010 = vmatprep.subr.mxu0 0.0
    %1011 = vmatpush1.msra.mxu0 0.0
    %1012 = vmatprep.subr.mxu0 0.0
    %1013 = vmatpush1.msra.mxu0 0.0
    %1014 = vmatprep.subr.mxu0 0.0
    %1015 = vmatpush1.msra.mxu0 0.0
    %1016 = vmatprep.subr.mxu0 0.0
    %1017 = vmatpush1.msra.mxu0 0.0
    %1018 = vmatprep.subr.mxu0 0.0
    %1019 = vmatpush1.msra.mxu0 0.0
    %1020 = vmatprep.subr.mxu0 0.0
    %1021 = vmatpush1.msra.mxu0 0.0
    %1022 = vmatprep.subr.mxu0 0.0
    %1023 = vmatpush1.msra.mxu0 0.0
    %1024 = vmatprep.mubr.f32.mxu0 0.0
    %1025 = vmatmul.mubr.f32.gmra.mrb[0].mxu0 %v958
    %v1026 = vpop.f32.mrb[0].mxu0
    %v1027 = vadd.f32 0.0, %v1026
    %v1028 = vpop.f32.mrb[0].mxu0
    %1029 = vdwg.mxu0
    %s1030 = scalar_lea.vmem [#allocation5], 24
    %v1031 = vld [vmem:[%s1030] sm:$0xff]
    %v1033 = vsel %vm148, %v1027, 0
    %1035 = vmatprep.subr.mxu0 0.0
    %1036 = vmatpush1.msra.mxu0 %v1031
    %1037 = vmatprep.subr.mxu0 0.0
    %1038 = vmatpush1.msra.mxu0 0.0
    %1039 = vmatprep.subr.mxu0 0.0
    %1040 = vmatpush1.msra.mxu0 0.0
    %1041 = vmatprep.subr.mxu0 0.0
    %1042 = vmatpush1.msra.mxu0 0.0
    %1043 = vmatprep.subr.mxu0 0.0
    %1044 = vmatpush1.msra.mxu0 0.0
    %1045 = vmatprep.subr.mxu0 0.0
    %1046 = vmatpush1.msra.mxu0 0.0
    %1047 = vmatprep.subr.mxu0 0.0
    %1048 = vmatpush1.msra.mxu0 0.0
    %1049 = vmatprep.subr.mxu0 0.0
    %1050 = vmatpush1.msra.mxu0 0.0
    %1051 = vmatprep.subr.mxu0 0.0
    %1052 = vmatpush1.msra.mxu0 0.0
    %1053 = vmatprep.subr.mxu0 0.0
    %1054 = vmatpush1.msra.mxu0 0.0
    %1055 = vmatprep.subr.mxu0 0.0
    %1056 = vmatpush1.msra.mxu0 0.0
    %1057 = vmatprep.subr.mxu0 0.0
    %1058 = vmatpush1.msra.mxu0 0.0
    %1059 = vmatprep.subr.mxu0 0.0
    %1060 = vmatpush1.msra.mxu0 0.0
    %1061 = vmatprep.subr.mxu0 0.0
    %1062 = vmatpush1.msra.mxu0 0.0
    %1063 = vmatprep.subr.mxu0 0.0
    %1064 = vmatpush1.msra.mxu0 0.0
    %1065 = vmatprep.subr.mxu0 0.0
    %1066 = vmatpush1.msra.mxu0 0.0
    %1067 = vmatprep.subr.mxu0 0.0
    %1068 = vmatpush1.msra.mxu0 0.0
    %1069 = vmatprep.subr.mxu0 0.0
    %1070 = vmatpush1.msra.mxu0 0.0
    %1071 = vmatprep.subr.mxu0 0.0
    %1072 = vmatpush1.msra.mxu0 0.0
    %1073 = vmatprep.subr.mxu0 0.0
    %1074 = vmatpush1.msra.mxu0 0.0
    %1075 = vmatprep.subr.mxu0 0.0
    %1076 = vmatpush1.msra.mxu0 0.0
    %1077 = vmatprep.subr.mxu0 0.0
    %1078 = vmatpush1.msra.mxu0 0.0
    %1079 = vmatprep.subr.mxu0 0.0
    %1080 = vmatpush1.msra.mxu0 0.0
    %1081 = vmatprep.subr.mxu0 0.0
    %1082 = vmatpush1.msra.mxu0 0.0
    %1083 = vmatprep.subr.mxu0 0.0
    %1084 = vmatpush1.msra.mxu0 0.0
    %1085 = vmatprep.subr.mxu0 0.0
    %1086 = vmatpush1.msra.mxu0 0.0
    %1087 = vmatprep.subr.mxu0 0.0
    %1088 = vmatpush1.msra.mxu0 0.0
    %1089 = vmatprep.subr.mxu0 0.0
    %1090 = vmatpush1.msra.mxu0 0.0
    %1091 = vmatprep.subr.mxu0 0.0
    %1092 = vmatpush1.msra.mxu0 0.0
    %1093 = vmatprep.subr.mxu0 0.0
    %1094 = vmatpush1.msra.mxu0 0.0
    %1095 = vmatprep.subr.mxu0 0.0
    %1096 = vmatpush1.msra.mxu0 0.0
    %1097 = vmatprep.subr.mxu0 0.0
    %1098 = vmatpush1.msra.mxu0 0.0
    %1099 = vmatprep.mubr.f32.mxu0 0.0
    %1100 = vmatmul.mubr.f32.gmra.mrb[0].mxu0 %v1033
    %v1101 = vpop.f32.mrb[0].mxu0
    %v1102 = vadd.f32 0.0, %v1101
    %v1103 = vpop.f32.mrb[0].mxu0
    %1104 = vdwg.mxu0
    %v1105 = vadd.f32 %v864, %v1102
    %v1107 = vlaneseq
    %v1108 = vshrl.u32 %v1107, 7
    %v1109 = vsub.s32 0, %v1108
    %v1110 = vrot.slane %v144, %v1109
    %v1112 = vadd.f32 %v1105, %v1110
    %1113 = vst.msk [vmem:[#allocation7] sm:$0xff] %vm62, %v1112
    %1115 = vrot.lane.b32.xlu0 %v141, 96
    %v1116 = vpop.permute.xlu0 %1115
    %v1117 = vsel %vm148, %v141, 0
    %v1119 = vsel %vm148, %v1116, 0
    %1121 = vmatprep.subr.mxu0 0.0
    %1122 = vmatpush1.xpose.msra.mxu0 %v1119
    %1123 = vmatprep.subr.mxu0 0.0
    %1124 = vmatpush1.xpose.msra.mxu0 0.0
    %1125 = vmatprep.subr.mxu0 0.0
    %1126 = vmatpush1.xpose.msra.mxu0 0.0
    %1127 = vmatprep.subr.mxu0 0.0
    %1128 = vmatpush1.xpose.msra.mxu0 0.0
    %1129 = vmatprep.subr.mxu0 0.0
    %1130 = vmatpush1.xpose.msra.mxu0 0.0
    %1131 = vmatprep.subr.mxu0 0.0
    %1132 = vmatpush1.xpose.msra.mxu0 0.0
    %1133 = vmatprep.subr.mxu0 0.0
    %1134 = vmatpush1.xpose.msra.mxu0 0.0
    %1135 = vmatprep.subr.mxu0 0.0
    %1136 = vmatpush1.xpose.msra.mxu0 0.0
    %1137 = vmatprep.subr.mxu0 0.0
    %1138 = vmatpush1.xpose.msra.mxu0 0.0
    %1139 = vmatprep.subr.mxu0 0.0
    %1140 = vmatpush1.xpose.msra.mxu0 0.0
    %1141 = vmatprep.subr.mxu0 0.0
    %1142 = vmatpush1.xpose.msra.mxu0 0.0
    %1143 = vmatprep.subr.mxu0 0.0
    %1144 = vmatpush1.xpose.msra.mxu0 0.0
    %1145 = vmatprep.subr.mxu0 0.0
    %1146 = vmatpush1.xpose.msra.mxu0 0.0
    %1147 = vmatprep.subr.mxu0 0.0
    %1148 = vmatpush1.xpose.msra.mxu0 0.0
    %1149 = vmatprep.subr.mxu0 0.0
    %1150 = vmatpush1.xpose.msra.mxu0 0.0
    %1151 = vmatprep.subr.mxu0 0.0
    %1152 = vmatpush1.xpose.msra.mxu0 0.0
    %1153 = vmatprep.subr.mxu0 0.0
    %1154 = vmatpush1.xpose.msra.mxu0 0.0
    %1155 = vmatprep.subr.mxu0 0.0
    %1156 = vmatpush1.xpose.msra.mxu0 0.0
    %1157 = vmatprep.subr.mxu0 0.0
    %1158 = vmatpush1.xpose.msra.mxu0 0.0
    %1159 = vmatprep.subr.mxu0 0.0
    %1160 = vmatpush1.xpose.msra.mxu0 0.0
    %1161 = vmatprep.subr.mxu0 0.0
    %1162 = vmatpush1.xpose.msra.mxu0 0.0
    %1163 = vmatprep.subr.mxu0 0.0
    %1164 = vmatpush1.xpose.msra.mxu0 0.0
    %1165 = vmatprep.subr.mxu0 0.0
    %1166 = vmatpush1.xpose.msra.mxu0 0.0
    %1167 = vmatprep.subr.mxu0 0.0
    %1168 = vmatpush1.xpose.msra.mxu0 0.0
    %1169 = vmatprep.subr.mxu0 0.0
    %1170 = vmatpush1.xpose.msra.mxu0 0.0
    %1171 = vmatprep.subr.mxu0 0.0
    %1172 = vmatpush1.xpose.msra.mxu0 0.0
    %1173 = vmatprep.subr.mxu0 0.0
    %1174 = vmatpush1.xpose.msra.mxu0 0.0
    %1175 = vmatprep.subr.mxu0 0.0
    %1176 = vmatpush1.xpose.msra.mxu0 0.0
    %1177 = vmatprep.subr.mxu0 0.0
    %1178 = vmatpush1.xpose.msra.mxu0 0.0
    %1179 = vmatprep.subr.mxu0 0.0
    %1180 = vmatpush1.xpose.msra.mxu0 0.0
    %1181 = vmatprep.subr.mxu0 0.0
    %1182 = vmatpush1.xpose.msra.mxu0 0.0
    %1183 = vmatprep.subr.mxu0 0.0
    %1184 = vmatpush1.xpose.msra.mxu0 0.0
    %1185 = vmatprep.mubr.f32.mxu0 0.0
    %1186 = vmatmul.mubr.f32.gmra.mrb[0].mxu0 %v1117
    %v1187 = vpop.f32.mrb[0].mxu0
    %v1188 = vadd.f32 0.0, %v1187
    %v1189 = vpop.f32.mrb[0].mxu0
    %1190 = vdwg.mxu0
    %v1191 = vsel %vm148, %v1188, -inf
    %1192 = vmax.xlane.f32.xlu0 %v1191
    %v1193 = vpop.xlane.xlu0 %1192
    %v1194 = vsub.f32 %v1188, %v1193
    %v1195 = vmul.f32 %v1194, 1.442695
    %v1196 = vpow.pop %v1195
    %v1197 = vsel %vm148, %v1196, 0.0
    %1198 = vadd.xlane.f32.xlu0 %v1197
    %v1199 = vpop.xlane.xlu0 %1198
    %v1200 = vrcp.pop %v1199
    %v1201 = vmul.f32 %v1196, %v1200
    %1202 = vrot.lane.b32.xlu0 %v141, 64
    %v1203 = vpop.permute.xlu0 %1202
    %v1206 = vsel %vm148, %v1201, 0
    %1208 = vmatprep.subr.mxu0 0.0
    %1209 = vmatpush1.msra.mxu0 %v1203
    %1210 = vmatprep.subr.mxu0 0.0
    %1211 = vmatpush1.msra.mxu0 0.0
    %1212 = vmatprep.subr.mxu0 0.0
    %1213 = vmatpush1.msra.mxu0 0.0
    %1214 = vmatprep.subr.mxu0 0.0
    %1215 = vmatpush1.msra.mxu0 0.0
    %1216 = vmatprep.subr.mxu0 0.0
    %1217 = vmatpush1.msra.mxu0 0.0
    %1218 = vmatprep.subr.mxu0 0.0
    %1219 = vmatpush1.msra.mxu0 0.0
    %1220 = vmatprep.subr.mxu0 0.0
    %1221 = vmatpush1.msra.mxu0 0.0
    %1222 = vmatprep.subr.mxu0 0.0
    %1223 = vmatpush1.msra.mxu0 0.0
    %1224 = vmatprep.subr.mxu0 0.0
    %1225 = vmatpush1.msra.mxu0 0.0
    %1226 = vmatprep.subr.mxu0 0.0
    %1227 = vmatpush1.msra.mxu0 0.0
    %1228 = vmatprep.subr.mxu0 0.0
    %1229 = vmatpush1.msra.mxu0 0.0
    %1230 = vmatprep.subr.mxu0 0.0
    %1231 = vmatpush1.msra.mxu0 0.0
    %1232 = vmatprep.subr.mxu0 0.0
    %1233 = vmatpush1.msra.mxu0 0.0
    %1234 = vmatprep.subr.mxu0 0.0
    %1235 = vmatpush1.msra.mxu0 0.0
    %1236 = vmatprep.subr.mxu0 0.0
    %1237 = vmatpush1.msra.mxu0 0.0
    %1238 = vmatprep.subr.mxu0 0.0
    %1239 = vmatpush1.msra.mxu0 0.0
    %1240 = vmatprep.subr.mxu0 0.0
    %1241 = vmatpush1.msra.mxu0 0.0
    %1242 = vmatprep.subr.mxu0 0.0
    %1243 = vmatpush1.msra.mxu0 0.0
    %1244 = vmatprep.subr.mxu0 0.0
    %1245 = vmatpush1.msra.mxu0 0.0
    %1246 = vmatprep.subr.mxu0 0.0
    %1247 = vmatpush1.msra.mxu0 0.0
    %1248 = vmatprep.subr.mxu0 0.0
    %1249 = vmatpush1.msra.mxu0 0.0
    %1250 = vmatprep.subr.mxu0 0.0
    %1251 = vmatpush1.msra.mxu0 0.0
    %1252 = vmatprep.subr.mxu0 0.0
    %1253 = vmatpush1.msra.mxu0 0.0
    %1254 = vmatprep.subr.mxu0 0.0
    %1255 = vmatpush1.msra.mxu0 0.0
    %1256 = vmatprep.subr.mxu0 0.0
    %1257 = vmatpush1.msra.mxu0 0.0
    %1258 = vmatprep.subr.mxu0 0.0
    %1259 = vmatpush1.msra.mxu0 0.0
    %1260 = vmatprep.subr.mxu0 0.0
    %1261 = vmatpush1.msra.mxu0 0.0
    %1262 = vmatprep.subr.mxu0 0.0
    %1263 = vmatpush1.msra.mxu0 0.0
    %1264 = vmatprep.subr.mxu0 0.0
    %1265 = vmatpush1.msra.mxu0 0.0
    %1266 = vmatprep.subr.mxu0 0.0
    %1267 = vmatpush1.msra.mxu0 0.0
    %1268 = vmatprep.subr.mxu0 0.0
    %1269 = vmatpush1.msra.mxu0 0.0
    %1270 = vmatprep.subr.mxu0 0.0
    %1271 = vmatpush1.msra.mxu0 0.0
    %1272 = vmatprep.mubr.f32.mxu0 0.0
    %1273 = vmatmul.mubr.f32.gmra.mrb[0].mxu0 %v1206
    %v1274 = vpop.f32.mrb[0].mxu0
    %v1275 = vadd.f32 0.0, %v1274
    %v1276 = vpop.f32.mrb[0].mxu0
    %1277 = vdwg.mxu0
    %v1278 = vld [vmem:[#allocation5] sm:$0xff]
    %1279 = vrot.lane.b32.xlu0 %v141, 120
    %v1280 = vpop.permute.xlu0 %1279
    %1281 = vrot.lane.b32.xlu0 %v141, 88
    %v1282 = vpop.permute.xlu0 %1281
    %v1283 = vsel %vm148, %v1280, 0
    %v1285 = vsel %vm148, %v1282, 0
    %1287 = vmatprep.subr.mxu0 0.0
    %1288 = vmatpush1.xpose.msra.mxu0 %v1285
    %1289 = vmatprep.subr.mxu0 0.0
    %1290 = vmatpush1.xpose.msra.mxu0 0.0
    %1291 = vmatprep.subr.mxu0 0.0
    %1292 = vmatpush1.xpose.msra.mxu0 0.0
    %1293 = vmatprep.subr.mxu0 0.0
    %1294 = vmatpush1.xpose.msra.mxu0 0.0
    %1295 = vmatprep.subr.mxu0 0.0
    %1296 = vmatpush1.xpose.msra.mxu0 0.0
    %1297 = vmatprep.subr.mxu0 0.0
    %1298 = vmatpush1.xpose.msra.mxu0 0.0
    %1299 = vmatprep.subr.mxu0 0.0
    %1300 = vmatpush1.xpose.msra.mxu0 0.0
    %1301 = vmatprep.subr.mxu0 0.0
    %1302 = vmatpush1.xpose.msra.mxu0 0.0
    %1303 = vmatprep.subr.mxu0 0.0
    %1304 = vmatpush1.xpose.msra.mxu0 0.0
    %1305 = vmatprep.subr.mxu0 0.0
    %1306 = vmatpush1.xpose.msra.mxu0 0.0
    %1307 = vmatprep.subr.mxu0 0.0
    %1308 = vmatpush1.xpose.msra.mxu0 0.0
    %1309 = vmatprep.subr.mxu0 0.0
    %1310 = vmatpush1.xpose.msra.mxu0 0.0
    %1311 = vmatprep.subr.mxu0 0.0
    %1312 = vmatpush1.xpose.msra.mxu0 0.0
    %1313 = vmatprep.subr.mxu0 0.0
    %1314 = vmatpush1.xpose.msra.mxu0 0.0
    %1315 = vmatprep.subr.mxu0 0.0
    %1316 = vmatpush1.xpose.msra.mxu0 0.0
    %1317 = vmatprep.subr.mxu0 0.0
    %1318 = vmatpush1.xpose.msra.mxu0 0.0
    %1319 = vmatprep.subr.mxu0 0.0
    %1320 = vmatpush1.xpose.msra.mxu0 0.0
    %1321 = vmatprep.subr.mxu0 0.0
    %1322 = vmatpush1.xpose.msra.mxu0 0.0
    %1323 = vmatprep.subr.mxu0 0.0
    %1324 = vmatpush1.xpose.msra.mxu0 0.0
    %1325 = vmatprep.subr.mxu0 0.0
    %1326 = vmatpush1.xpose.msra.mxu0 0.0
    %1327 = vmatprep.subr.mxu0 0.0
    %1328 = vmatpush1.xpose.msra.mxu0 0.0
    %1329 = vmatprep.subr.mxu0 0.0
    %1330 = vmatpush1.xpose.msra.mxu0 0.0
    %1331 = vmatprep.subr.mxu0 0.0
    %1332 = vmatpush1.xpose.msra.mxu0 0.0
    %1333 = vmatprep.subr.mxu0 0.0
    %1334 = vmatpush1.xpose.msra.mxu0 0.0
    %1335 = vmatprep.subr.mxu0 0.0
    %1336 = vmatpush1.xpose.msra.mxu0 0.0
    %1337 = vmatprep.subr.mxu0 0.0
    %1338 = vmatpush1.xpose.msra.mxu0 0.0
    %1339 = vmatprep.subr.mxu0 0.0
    %1340 = vmatpush1.xpose.msra.mxu0 0.0
    %1341 = vmatprep.subr.mxu0 0.0
    %1342 = vmatpush1.xpose.msra.mxu0 0.0
    %1343 = vmatprep.subr.mxu0 0.0
    %1344 = vmatpush1.xpose.msra.mxu0 0.0
    %1345 = vmatprep.subr.mxu0 0.0
    %1346 = vmatpush1.xpose.msra.mxu0 0.0
    %1347 = vmatprep.subr.mxu0 0.0
    %1348 = vmatpush1.xpose.msra.mxu0 0.0
    %1349 = vmatprep.subr.mxu0 0.0
    %1350 = vmatpush1.xpose.msra.mxu0 0.0
    %1351 = vmatprep.mubr.f32.mxu0 0.0
    %1352 = vmatmul.mubr.f32.gmra.mrb[0].mxu0 %v1283
    %v1353 = vpop.f32.mrb[0].mxu0
    %v1354 = vadd.f32 0.0, %v1353
    %v1355 = vpop.f32.mrb[0].mxu0
    %1356 = vdwg.mxu0
    %v1357 = vsel %vm148, %v1354, -inf
    %1358 = vmax.xlane.f32.xlu0 %v1357
    %v1359 = vpop.xlane.xlu0 %1358
    %v1360 = vsub.f32 %v1354, %v1359
    %v1361 = vmul.f32 %v1360, 1.442695
    %v1362 = vpow.pop %v1361
    %v1363 = vsel %vm148, %v1362, 0.0
    %1364 = vadd.xlane.f32.xlu0 %v1363
    %v1365 = vpop.xlane.xlu0 %1364
    %v1366 = vrcp.pop %v1365
    %v1367 = vmul.f32 %v1362, %v1366
    %1368 = vrot.lane.b32.xlu0 %v141, 56
    %v1369 = vpop.permute.xlu0 %1368
    %v1372 = vsel %vm148, %v1367, 0
    %1374 = vmatprep.subr.mxu0 0.0
    %1375 = vmatpush1.msra.mxu0 %v1369
    %1376 = vmatprep.subr.mxu0 0.0
    %1377 = vmatpush1.msra.mxu0 0.0
    %1378 = vmatprep.subr.mxu0 0.0
    %1379 = vmatpush1.msra.mxu0 0.0
    %1380 = vmatprep.subr.mxu0 0.0
    %1381 = vmatpush1.msra.mxu0 0.0
    %1382 = vmatprep.subr.mxu0 0.0
    %1383 = vmatpush1.msra.mxu0 0.0
    %1384 = vmatprep.subr.mxu0 0.0
    %1385 = vmatpush1.msra.mxu0 0.0
    %1386 = vmatprep.subr.mxu0 0.0
    %1387 = vmatpush1.msra.mxu0 0.0
    %1388 = vmatprep.subr.mxu0 0.0
    %1389 = vmatpush1.msra.mxu0 0.0
    %1390 = vmatprep.subr.mxu0 0.0
    %1391 = vmatpush1.msra.mxu0 0.0
    %1392 = vmatprep.subr.mxu0 0.0
    %1393 = vmatpush1.msra.mxu0 0.0
    %1394 = vmatprep.subr.mxu0 0.0
    %1395 = vmatpush1.msra.mxu0 0.0
    %1396 = vmatprep.subr.mxu0 0.0
    %1397 = vmatpush1.msra.mxu0 0.0
    %1398 = vmatprep.subr.mxu0 0.0
    %1399 = vmatpush1.msra.mxu0 0.0
    %1400 = vmatprep.subr.mxu0 0.0
    %1401 = vmatpush1.msra.mxu0 0.0
    %1402 = vmatprep.subr.mxu0 0.0
    %1403 = vmatpush1.msra.mxu0 0.0
    %1404 = vmatprep.subr.mxu0 0.0
    %1405 = vmatpush1.msra.mxu0 0.0
    %1406 = vmatprep.subr.mxu0 0.0
    %1407 = vmatpush1.msra.mxu0 0.0
    %1408 = vmatprep.subr.mxu0 0.0
    %1409 = vmatpush1.msra.mxu0 0.0
    %1410 = vmatprep.subr.mxu0 0.0
    %1411 = vmatpush1.msra.mxu0 0.0
    %1412 = vmatprep.subr.mxu0 0.0
    %1413 = vmatpush1.msra.mxu0 0.0
    %1414 = vmatprep.subr.mxu0 0.0
    %1415 = vmatpush1.msra.mxu0 0.0
    %1416 = vmatprep.subr.mxu0 0.0
    %1417 = vmatpush1.msra.mxu0 0.0
    %1418 = vmatprep.subr.mxu0 0.0
    %1419 = vmatpush1.msra.mxu0 0.0
    %1420 = vmatprep.subr.mxu0 0.0
    %1421 = vmatpush1.msra.mxu0 0.0
    %1422 = vmatprep.subr.mxu0 0.0
    %1423 = vmatpush1.msra.mxu0 0.0
    %1424 = vmatprep.subr.mxu0 0.0
    %1425 = vmatpush1.msra.mxu0 0.0
    %1426 = vmatprep.subr.mxu0 0.0
    %1427 = vmatpush1.msra.mxu0 0.0
    %1428 = vmatprep.subr.mxu0 0.0
    %1429 = vmatpush1.msra.mxu0 0.0
    %1430 = vmatprep.subr.mxu0 0.0
    %1431 = vmatpush1.msra.mxu0 0.0
    %1432 = vmatprep.subr.mxu0 0.0
    %1433 = vmatpush1.msra.mxu0 0.0
    %1434 = vmatprep.subr.mxu0 0.0
    %1435 = vmatpush1.msra.mxu0 0.0
    %1436 = vmatprep.subr.mxu0 0.0
    %1437 = vmatpush1.msra.mxu0 0.0
    %1438 = vmatprep.mubr.f32.mxu0 0.0
    %1439 = vmatmul.mubr.f32.gmra.mrb[0].mxu0 %v1372
    %v1440 = vpop.f32.mrb[0].mxu0
    %v1441 = vadd.f32 0.0, %v1440
    %v1442 = vpop.f32.mrb[0].mxu0
    %1443 = vdwg.mxu0
    %v1444 = vld [vmem:[%s476] sm:$0xff]
    %v1446 = vsel %vm148, %v1441, 0
    %1448 = vmatprep.subr.mxu0 0.0
    %1449 = vmatpush1.msra.mxu0 %v1444
    %1450 = vmatprep.subr.mxu0 0.0
    %1451 = vmatpush1.msra.mxu0 0.0
    %1452 = vmatprep.subr.mxu0 0.0
    %1453 = vmatpush1.msra.mxu0 0.0
    %1454 = vmatprep.subr.mxu0 0.0
    %1455 = vmatpush1.msra.mxu0 0.0
    %1456 = vmatprep.subr.mxu0 0.0
    %1457 = vmatpush1.msra.mxu0 0.0
    %1458 = vmatprep.subr.mxu0 0.0
    %1459 = vmatpush1.msra.mxu0 0.0
    %1460 = vmatprep.subr.mxu0 0.0
    %1461 = vmatpush1.msra.mxu0 0.0
    %1462 = vmatprep.subr.mxu0 0.0
    %1463 = vmatpush1.msra.mxu0 0.0
    %1464 = vmatprep.subr.mxu0 0.0
    %1465 = vmatpush1.msra.mxu0 0.0
    %1466 = vmatprep.subr.mxu0 0.0
    %1467 = vmatpush1.msra.mxu0 0.0
    %1468 = vmatprep.subr.mxu0 0.0
    %1469 = vmatpush1.msra.mxu0 0.0
    %1470 = vmatprep.subr.mxu0 0.0
    %1471 = vmatpush1.msra.mxu0 0.0
    %1472 = vmatprep.subr.mxu0 0.0
    %1473 = vmatpush1.msra.mxu0 0.0
    %1474 = vmatprep.subr.mxu0 0.0
    %1475 = vmatpush1.msra.mxu0 0.0
    %1476 = vmatprep.subr.mxu0 0.0
    %1477 = vmatpush1.msra.mxu0 0.0
    %1478 = vmatprep.subr.mxu0 0.0
    %1479 = vmatpush1.msra.mxu0 0.0
    %1480 = vmatprep.subr.mxu0 0.0
    %1481 = vmatpush1.msra.mxu0 0.0
    %1482 = vmatprep.subr.mxu0 0.0
    %1483 = vmatpush1.msra.mxu0 0.0
    %1484 = vmatprep.subr.mxu0 0.0
    %1485 = vmatpush1.msra.mxu0 0.0
    %1486 = vmatprep.subr.mxu0 0.0
    %1487 = vmatpush1.msra.mxu0 0.0
    %1488 = vmatprep.subr.mxu0 0.0
    %1489 = vmatpush1.msra.mxu0 0.0
    %1490 = vmatprep.subr.mxu0 0.0
    %1491 = vmatpush1.msra.mxu0 0.0
    %1492 = vmatprep.subr.mxu0 0.0
    %1493 = vmatpush1.msra.mxu0 0.0
    %1494 = vmatprep.subr.mxu0 0.0
    %1495 = vmatpush1.msra.mxu0 0.0
    %1496 = vmatprep.subr.mxu0 0.0
    %1497 = vmatpush1.msra.mxu0 0.0
    %1498 = vmatprep.subr.mxu0 0.0
    %1499 = vmatpush1.msra.mxu0 0.0
    %1500 = vmatprep.subr.mxu0 0.0
    %1501 = vmatpush1.msra.mxu0 0.0
    %1502 = vmatprep.subr.mxu0 0.0
    %1503 = vmatpush1.msra.mxu0 0.0
    %1504 = vmatprep.subr.mxu0 0.0
    %1505 = vmatpush1.msra.mxu0 0.0
    %1506 = vmatprep.subr.mxu0 0.0
    %1507 = vmatpush1.msra.mxu0 0.0
    %1508 = vmatprep.subr.mxu0 0.0
    %1509 = vmatpush1.msra.mxu0 0.0
    %1510 = vmatprep.subr.mxu0 0.0
    %1511 = vmatpush1.msra.mxu0 0.0
    %1512 = vmatprep.mubr.f32.mxu0 0.0
    %1513 = vmatmul.mubr.f32.gmra.mrb[0].mxu0 %v1446
    %v1514 = vpop.f32.mrb[0].mxu0
    %v1515 = vadd.f32 0.0, %v1514
    %v1516 = vpop.f32.mrb[0].mxu0
    %1517 = vdwg.mxu0
    %v1519 = vsel %vm148, %v1275, 0
    %1521 = vmatprep.subr.mxu0 0.0
    %1522 = vmatpush1.msra.mxu0 %v1278
    %1523 = vmatprep.subr.mxu0 0.0
    %1524 = vmatpush1.msra.mxu0 0.0
    %1525 = vmatprep.subr.mxu0 0.0
    %1526 = vmatpush1.msra.mxu0 0.0
    %1527 = vmatprep.subr.mxu0 0.0
    %1528 = vmatpush1.msra.mxu0 0.0
    %1529 = vmatprep.subr.mxu0 0.0
    %1530 = vmatpush1.msra.mxu0 0.0
    %1531 = vmatprep.subr.mxu0 0.0
    %1532 = vmatpush1.msra.mxu0 0.0
    %1533 = vmatprep.subr.mxu0 0.0
    %1534 = vmatpush1.msra.mxu0 0.0
    %1535 = vmatprep.subr.mxu0 0.0
    %1536 = vmatpush1.msra.mxu0 0.0
    %1537 = vmatprep.subr.mxu0 0.0
    %1538 = vmatpush1.msra.mxu0 0.0
    %1539 = vmatprep.subr.mxu0 0.0
    %1540 = vmatpush1.msra.mxu0 0.0
    %1541 = vmatprep.subr.mxu0 0.0
    %1542 = vmatpush1.msra.mxu0 0.0
    %1543 = vmatprep.subr.mxu0 0.0
    %1544 = vmatpush1.msra.mxu0 0.0
    %1545 = vmatprep.subr.mxu0 0.0
    %1546 = vmatpush1.msra.mxu0 0.0
    %1547 = vmatprep.subr.mxu0 0.0
    %1548 = vmatpush1.msra.mxu0 0.0
    %1549 = vmatprep.subr.mxu0 0.0
    %1550 = vmatpush1.msra.mxu0 0.0
    %1551 = vmatprep.subr.mxu0 0.0
    %1552 = vmatpush1.msra.mxu0 0.0
    %1553 = vmatprep.subr.mxu0 0.0
    %1554 = vmatpush1.msra.mxu0 0.0
    %1555 = vmatprep.subr.mxu0 0.0
    %1556 = vmatpush1.msra.mxu0 0.0
    %1557 = vmatprep.subr.mxu0 0.0
    %1558 = vmatpush1.msra.mxu0 0.0
    %1559 = vmatprep.subr.mxu0 0.0
    %1560 = vmatpush1.msra.mxu0 0.0
    %1561 = vmatprep.subr.mxu0 0.0
    %1562 = vmatpush1.msra.mxu0 0.0
    %1563 = vmatprep.subr.mxu0 0.0
    %1564 = vmatpush1.msra.mxu0 0.0
    %1565 = vmatprep.subr.mxu0 0.0
    %1566 = vmatpush1.msra.mxu0 0.0
    %1567 = vmatprep.subr.mxu0 0.0
    %1568 = vmatpush1.msra.mxu0 0.0
    %1569 = vmatprep.subr.mxu0 0.0
    %1570 = vmatpush1.msra.mxu0 0.0
    %1571 = vmatprep.subr.mxu0 0.0
    %1572 = vmatpush1.msra.mxu0 0.0
    %1573 = vmatprep.subr.mxu0 0.0
    %1574 = vmatpush1.msra.mxu0 0.0
    %1575 = vmatprep.subr.mxu0 0.0
    %1576 = vmatpush1.msra.mxu0 0.0
    %1577 = vmatprep.subr.mxu0 0.0
    %1578 = vmatpush1.msra.mxu0 0.0
    %1579 = vmatprep.subr.mxu0 0.0
    %1580 = vmatpush1.msra.mxu0 0.0
    %1581 = vmatprep.subr.mxu0 0.0
    %1582 = vmatpush1.msra.mxu0 0.0
    %1583 = vmatprep.subr.mxu0 0.0
    %1584 = vmatpush1.msra.mxu0 0.0
    %1585 = vmatprep.mubr.f32.mxu0 0.0
    %1586 = vmatmul.mubr.f32.gmra.mrb[0].mxu0 %v1519
    %v1587 = vpop.f32.mrb[0].mxu0
    %v1588 = vadd.f32 %v1515, %v1587
    %v1589 = vpop.f32.mrb[0].mxu0
    %1590 = vdwg.mxu0
    %1591 = vrot.lane.b32.xlu0 %v141, 112
    %v1592 = vpop.permute.xlu0 %1591
    %1593 = vrot.lane.b32.xlu0 %v141, 80
    %v1594 = vpop.permute.xlu0 %1593
    %v1595 = vsel %vm148, %v1592, 0
    %v1597 = vsel %vm148, %v1594, 0
    %1599 = vmatprep.subr.mxu0 0.0
    %1600 = vmatpush1.xpose.msra.mxu0 %v1597
    %1601 = vmatprep.subr.mxu0 0.0
    %1602 = vmatpush1.xpose.msra.mxu0 0.0
    %1603 = vmatprep.subr.mxu0 0.0
    %1604 = vmatpush1.xpose.msra.mxu0 0.0
    %1605 = vmatprep.subr.mxu0 0.0
    %1606 = vmatpush1.xpose.msra.mxu0 0.0
    %1607 = vmatprep.subr.mxu0 0.0
    %1608 = vmatpush1.xpose.msra.mxu0 0.0
    %1609 = vmatprep.subr.mxu0 0.0
    %1610 = vmatpush1.xpose.msra.mxu0 0.0
    %1611 = vmatprep.subr.mxu0 0.0
    %1612 = vmatpush1.xpose.msra.mxu0 0.0
    %1613 = vmatprep.subr.mxu0 0.0
    %1614 = vmatpush1.xpose.msra.mxu0 0.0
    %1615 = vmatprep.subr.mxu0 0.0
    %1616 = vmatpush1.xpose.msra.mxu0 0.0
    %1617 = vmatprep.subr.mxu0 0.0
    %1618 = vmatpush1.xpose.msra.mxu0 0.0
    %1619 = vmatprep.subr.mxu0 0.0
    %1620 = vmatpush1.xpose.msra.mxu0 0.0
    %1621 = vmatprep.subr.mxu0 0.0
    %1622 = vmatpush1.xpose.msra.mxu0 0.0
    %1623 = vmatprep.subr.mxu0 0.0
    %1624 = vmatpush1.xpose.msra.mxu0 0.0
    %1625 = vmatprep.subr.mxu0 0.0
    %1626 = vmatpush1.xpose.msra.mxu0 0.0
    %1627 = vmatprep.subr.mxu0 0.0
    %1628 = vmatpush1.xpose.msra.mxu0 0.0
    %1629 = vmatprep.subr.mxu0 0.0
    %1630 = vmatpush1.xpose.msra.mxu0 0.0
    %1631 = vmatprep.subr.mxu0 0.0
    %1632 = vmatpush1.xpose.msra.mxu0 0.0
    %1633 = vmatprep.subr.mxu0 0.0
    %1634 = vmatpush1.xpose.msra.mxu0 0.0
    %1635 = vmatprep.subr.mxu0 0.0
    %1636 = vmatpush1.xpose.msra.mxu0 0.0
    %1637 = vmatprep.subr.mxu0 0.0
    %1638 = vmatpush1.xpose.msra.mxu0 0.0
    %1639 = vmatprep.subr.mxu0 0.0
    %1640 = vmatpush1.xpose.msra.mxu0 0.0
    %1641 = vmatprep.subr.mxu0 0.0
    %1642 = vmatpush1.xpose.msra.mxu0 0.0
    %1643 = vmatprep.subr.mxu0 0.0
    %1644 = vmatpush1.xpose.msra.mxu0 0.0
    %1645 = vmatprep.subr.mxu0 0.0
    %1646 = vmatpush1.xpose.msra.mxu0 0.0
    %1647 = vmatprep.subr.mxu0 0.0
    %1648 = vmatpush1.xpose.msra.mxu0 0.0
    %1649 = vmatprep.subr.mxu0 0.0
    %1650 = vmatpush1.xpose.msra.mxu0 0.0
    %1651 = vmatprep.subr.mxu0 0.0
    %1652 = vmatpush1.xpose.msra.mxu0 0.0
    %1653 = vmatprep.subr.mxu0 0.0
    %1654 = vmatpush1.xpose.msra.mxu0 0.0
    %1655 = vmatprep.subr.mxu0 0.0
    %1656 = vmatpush1.xpose.msra.mxu0 0.0
    %1657 = vmatprep.subr.mxu0 0.0
    %1658 = vmatpush1.xpose.msra.mxu0 0.0
    %1659 = vmatprep.subr.mxu0 0.0
    %1660 = vmatpush1.xpose.msra.mxu0 0.0
    %1661 = vmatprep.subr.mxu0 0.0
    %1662 = vmatpush1.xpose.msra.mxu0 0.0
    %1663 = vmatprep.mubr.f32.mxu0 0.0
    %1664 = vmatmul.mubr.f32.gmra.mrb[0].mxu0 %v1595
    %v1665 = vpop.f32.mrb[0].mxu0
    %v1666 = vadd.f32 0.0, %v1665
    %v1667 = vpop.f32.mrb[0].mxu0
    %1668 = vdwg.mxu0
    %v1669 = vsel %vm148, %v1666, -inf
    %1670 = vmax.xlane.f32.xlu0 %v1669
    %v1671 = vpop.xlane.xlu0 %1670
    %v1672 = vsub.f32 %v1666, %v1671
    %v1673 = vmul.f32 %v1672, 1.442695
    %v1674 = vpow.pop %v1673
    %v1675 = vsel %vm148, %v1674, 0.0
    %1676 = vadd.xlane.f32.xlu0 %v1675
    %v1677 = vpop.xlane.xlu0 %1676
    %v1678 = vrcp.pop %v1677
    %v1679 = vmul.f32 %v1674, %v1678
    %1680 = vrot.lane.b32.xlu0 %v141, 48
    %v1681 = vpop.permute.xlu0 %1680
    %v1684 = vsel %vm148, %v1679, 0
    %1686 = vmatprep.subr.mxu0 0.0
    %1687 = vmatpush1.msra.mxu0 %v1681
    %1688 = vmatprep.subr.mxu0 0.0
    %1689 = vmatpush1.msra.mxu0 0.0
    %1690 = vmatprep.subr.mxu0 0.0
    %1691 = vmatpush1.msra.mxu0 0.0
    %1692 = vmatprep.subr.mxu0 0.0
    %1693 = vmatpush1.msra.mxu0 0.0
    %1694 = vmatprep.subr.mxu0 0.0
    %1695 = vmatpush1.msra.mxu0 0.0
    %1696 = vmatprep.subr.mxu0 0.0
    %1697 = vmatpush1.msra.mxu0 0.0
    %1698 = vmatprep.subr.mxu0 0.0
    %1699 = vmatpush1.msra.mxu0 0.0
    %1700 = vmatprep.subr.mxu0 0.0
    %1701 = vmatpush1.msra.mxu0 0.0
    %1702 = vmatprep.subr.mxu0 0.0
    %1703 = vmatpush1.msra.mxu0 0.0
    %1704 = vmatprep.subr.mxu0 0.0
    %1705 = vmatpush1.msra.mxu0 0.0
    %1706 = vmatprep.subr.mxu0 0.0
    %1707 = vmatpush1.msra.mxu0 0.0
    %1708 = vmatprep.subr.mxu0 0.0
    %1709 = vmatpush1.msra.mxu0 0.0
    %1710 = vmatprep.subr.mxu0 0.0
    %1711 = vmatpush1.msra.mxu0 0.0
    %1712 = vmatprep.subr.mxu0 0.0
    %1713 = vmatpush1.msra.mxu0 0.0
    %1714 = vmatprep.subr.mxu0 0.0
    %1715 = vmatpush1.msra.mxu0 0.0
    %1716 = vmatprep.subr.mxu0 0.0
    %1717 = vmatpush1.msra.mxu0 0.0
    %1718 = vmatprep.subr.mxu0 0.0
    %1719 = vmatpush1.msra.mxu0 0.0
    %1720 = vmatprep.subr.mxu0 0.0
    %1721 = vmatpush1.msra.mxu0 0.0
    %1722 = vmatprep.subr.mxu0 0.0
    %1723 = vmatpush1.msra.mxu0 0.0
    %1724 = vmatprep.subr.mxu0 0.0
    %1725 = vmatpush1.msra.mxu0 0.0
    %1726 = vmatprep.subr.mxu0 0.0
    %1727 = vmatpush1.msra.mxu0 0.0
    %1728 = vmatprep.subr.mxu0 0.0
    %1729 = vmatpush1.msra.mxu0 0.0
    %1730 = vmatprep.subr.mxu0 0.0
    %1731 = vmatpush1.msra.mxu0 0.0
    %1732 = vmatprep.subr.mxu0 0.0
    %1733 = vmatpush1.msra.mxu0 0.0
    %1734 = vmatprep.subr.mxu0 0.0
    %1735 = vmatpush1.msra.mxu0 0.0
    %1736 = vmatprep.subr.mxu0 0.0
    %1737 = vmatpush1.msra.mxu0 0.0
    %1738 = vmatprep.subr.mxu0 0.0
    %1739 = vmatpush1.msra.mxu0 0.0
    %1740 = vmatprep.subr.mxu0 0.0
    %1741 = vmatpush1.msra.mxu0 0.0
    %1742 = vmatprep.subr.mxu0 0.0
    %1743 = vmatpush1.msra.mxu0 0.0
    %1744 = vmatprep.subr.mxu0 0.0
    %1745 = vmatpush1.msra.mxu0 0.0
    %1746 = vmatprep.subr.mxu0 0.0
    %1747 = vmatpush1.msra.mxu0 0.0
    %1748 = vmatprep.subr.mxu0 0.0
    %1749 = vmatpush1.msra.mxu0 0.0
    %1750 = vmatprep.mubr.f32.mxu0 0.0
    %1751 = vmatmul.mubr.f32.gmra.mrb[0].mxu0 %v1684
    %v1752 = vpop.f32.mrb[0].mxu0
    %v1753 = vadd.f32 0.0, %v1752
    %v1754 = vpop.f32.mrb[0].mxu0
    %1755 = vdwg.mxu0
    %v1756 = vld [vmem:[%s789] sm:$0xff]
    %v1758 = vsel %vm148, %v1753, 0
    %1760 = vmatprep.subr.mxu0 0.0
    %1761 = vmatpush1.msra.mxu0 %v1756
    %1762 = vmatprep.subr.mxu0 0.0
    %1763 = vmatpush1.msra.mxu0 0.0
    %1764 = vmatprep.subr.mxu0 0.0
    %1765 = vmatpush1.msra.mxu0 0.0
    %1766 = vmatprep.subr.mxu0 0.0
    %1767 = vmatpush1.msra.mxu0 0.0
    %1768 = vmatprep.subr.mxu0 0.0
    %1769 = vmatpush1.msra.mxu0 0.0
    %1770 = vmatprep.subr.mxu0 0.0
    %1771 = vmatpush1.msra.mxu0 0.0
    %1772 = vmatprep.subr.mxu0 0.0
    %1773 = vmatpush1.msra.mxu0 0.0
    %1774 = vmatprep.subr.mxu0 0.0
    %1775 = vmatpush1.msra.mxu0 0.0
    %1776 = vmatprep.subr.mxu0 0.0
    %1777 = vmatpush1.msra.mxu0 0.0
    %1778 = vmatprep.subr.mxu0 0.0
    %1779 = vmatpush1.msra.mxu0 0.0
    %1780 = vmatprep.subr.mxu0 0.0
    %1781 = vmatpush1.msra.mxu0 0.0
    %1782 = vmatprep.subr.mxu0 0.0
    %1783 = vmatpush1.msra.mxu0 0.0
    %1784 = vmatprep.subr.mxu0 0.0
    %1785 = vmatpush1.msra.mxu0 0.0
    %1786 = vmatprep.subr.mxu0 0.0
    %1787 = vmatpush1.msra.mxu0 0.0
    %1788 = vmatprep.subr.mxu0 0.0
    %1789 = vmatpush1.msra.mxu0 0.0
    %1790 = vmatprep.subr.mxu0 0.0
    %1791 = vmatpush1.msra.mxu0 0.0
    %1792 = vmatprep.subr.mxu0 0.0
    %1793 = vmatpush1.msra.mxu0 0.0
    %1794 = vmatprep.subr.mxu0 0.0
    %1795 = vmatpush1.msra.mxu0 0.0
    %1796 = vmatprep.subr.mxu0 0.0
    %1797 = vmatpush1.msra.mxu0 0.0
    %1798 = vmatprep.subr.mxu0 0.0
    %1799 = vmatpush1.msra.mxu0 0.0
    %1800 = vmatprep.subr.mxu0 0.0
    %1801 = vmatpush1.msra.mxu0 0.0
    %1802 = vmatprep.subr.mxu0 0.0
    %1803 = vmatpush1.msra.mxu0 0.0
    %1804 = vmatprep.subr.mxu0 0.0
    %1805 = vmatpush1.msra.mxu0 0.0
    %1806 = vmatprep.subr.mxu0 0.0
    %1807 = vmatpush1.msra.mxu0 0.0
    %1808 = vmatprep.subr.mxu0 0.0
    %1809 = vmatpush1.msra.mxu0 0.0
    %1810 = vmatprep.subr.mxu0 0.0
    %1811 = vmatpush1.msra.mxu0 0.0
    %1812 = vmatprep.subr.mxu0 0.0
    %1813 = vmatpush1.msra.mxu0 0.0
    %1814 = vmatprep.subr.mxu0 0.0
    %1815 = vmatpush1.msra.mxu0 0.0
    %1816 = vmatprep.subr.mxu0 0.0
    %1817 = vmatpush1.msra.mxu0 0.0
    %1818 = vmatprep.subr.mxu0 0.0
    %1819 = vmatpush1.msra.mxu0 0.0
    %1820 = vmatprep.subr.mxu0 0.0
    %1821 = vmatpush1.msra.mxu0 0.0
    %1822 = vmatprep.subr.mxu0 0.0
    %1823 = vmatpush1.msra.mxu0 0.0
    %1824 = vmatprep.mubr.f32.mxu0 0.0
    %1825 = vmatmul.mubr.f32.gmra.mrb[0].mxu0 %v1758
    %v1826 = vpop.f32.mrb[0].mxu0
    %v1827 = vadd.f32 0.0, %v1826
    %v1828 = vpop.f32.mrb[0].mxu0
    %1829 = vdwg.mxu0
    %v1830 = vadd.f32 %v1588, %v1827
    %1831 = vrot.lane.b32.xlu0 %v141, 104
    %v1832 = vpop.permute.xlu0 %1831
    %1833 = vrot.lane.b32.xlu0 %v141, 72
    %v1834 = vpop.permute.xlu0 %1833
    %v1835 = vsel %vm148, %v1832, 0
    %v1837 = vsel %vm148, %v1834, 0
    %1839 = vmatprep.subr.mxu0 0.0
    %1840 = vmatpush1.xpose.msra.mxu0 %v1837
    %1841 = vmatprep.subr.mxu0 0.0
    %1842 = vmatpush1.xpose.msra.mxu0 0.0
    %1843 = vmatprep.subr.mxu0 0.0
    %1844 = vmatpush1.xpose.msra.mxu0 0.0
    %1845 = vmatprep.subr.mxu0 0.0
    %1846 = vmatpush1.xpose.msra.mxu0 0.0
    %1847 = vmatprep.subr.mxu0 0.0
    %1848 = vmatpush1.xpose.msra.mxu0 0.0
    %1849 = vmatprep.subr.mxu0 0.0
    %1850 = vmatpush1.xpose.msra.mxu0 0.0
    %1851 = vmatprep.subr.mxu0 0.0
    %1852 = vmatpush1.xpose.msra.mxu0 0.0
    %1853 = vmatprep.subr.mxu0 0.0
    %1854 = vmatpush1.xpose.msra.mxu0 0.0
    %1855 = vmatprep.subr.mxu0 0.0
    %1856 = vmatpush1.xpose.msra.mxu0 0.0
    %1857 = vmatprep.subr.mxu0 0.0
    %1858 = vmatpush1.xpose.msra.mxu0 0.0
    %1859 = vmatprep.subr.mxu0 0.0
    %1860 = vmatpush1.xpose.msra.mxu0 0.0
    %1861 = vmatprep.subr.mxu0 0.0
    %1862 = vmatpush1.xpose.msra.mxu0 0.0
    %1863 = vmatprep.subr.mxu0 0.0
    %1864 = vmatpush1.xpose.msra.mxu0 0.0
    %1865 = vmatprep.subr.mxu0 0.0
    %1866 = vmatpush1.xpose.msra.mxu0 0.0
    %1867 = vmatprep.subr.mxu0 0.0
    %1868 = vmatpush1.xpose.msra.mxu0 0.0
    %1869 = vmatprep.subr.mxu0 0.0
    %1870 = vmatpush1.xpose.msra.mxu0 0.0
    %1871 = vmatprep.subr.mxu0 0.0
    %1872 = vmatpush1.xpose.msra.mxu0 0.0
    %1873 = vmatprep.subr.mxu0 0.0
    %1874 = vmatpush1.xpose.msra.mxu0 0.0
    %1875 = vmatprep.subr.mxu0 0.0
    %1876 = vmatpush1.xpose.msra.mxu0 0.0
    %1877 = vmatprep.subr.mxu0 0.0
    %1878 = vmatpush1.xpose.msra.mxu0 0.0
    %1879 = vmatprep.subr.mxu0 0.0
    %1880 = vmatpush1.xpose.msra.mxu0 0.0
    %1881 = vmatprep.subr.mxu0 0.0
    %1882 = vmatpush1.xpose.msra.mxu0 0.0
    %1883 = vmatprep.subr.mxu0 0.0
    %1884 = vmatpush1.xpose.msra.mxu0 0.0
    %1885 = vmatprep.subr.mxu0 0.0
    %1886 = vmatpush1.xpose.msra.mxu0 0.0
    %1887 = vmatprep.subr.mxu0 0.0
    %1888 = vmatpush1.xpose.msra.mxu0 0.0
    %1889 = vmatprep.subr.mxu0 0.0
    %1890 = vmatpush1.xpose.msra.mxu0 0.0
    %1891 = vmatprep.subr.mxu0 0.0
    %1892 = vmatpush1.xpose.msra.mxu0 0.0
    %1893 = vmatprep.subr.mxu0 0.0
    %1894 = vmatpush1.xpose.msra.mxu0 0.0
    %1895 = vmatprep.subr.mxu0 0.0
    %1896 = vmatpush1.xpose.msra.mxu0 0.0
    %1897 = vmatprep.subr.mxu0 0.0
    %1898 = vmatpush1.xpose.msra.mxu0 0.0
    %1899 = vmatprep.subr.mxu0 0.0
    %1900 = vmatpush1.xpose.msra.mxu0 0.0
    %1901 = vmatprep.subr.mxu0 0.0
    %1902 = vmatpush1.xpose.msra.mxu0 0.0
    %1903 = vmatprep.mubr.f32.mxu0 0.0
    %1904 = vmatmul.mubr.f32.gmra.mrb[0].mxu0 %v1835
    %v1905 = vpop.f32.mrb[0].mxu0
    %v1906 = vadd.f32 0.0, %v1905
    %v1907 = vpop.f32.mrb[0].mxu0
    %1908 = vdwg.mxu0
    %v1909 = vsel %vm148, %v1906, -inf
    %1910 = vmax.xlane.f32.xlu0 %v1909
    %v1911 = vpop.xlane.xlu0 %1910
    %v1912 = vsub.f32 %v1906, %v1911
    %v1913 = vmul.f32 %v1912, 1.442695
    %v1914 = vpow.pop %v1913
    %v1915 = vsel %vm148, %v1914, 0.0
    %1916 = vadd.xlane.f32.xlu0 %v1915
    %v1917 = vpop.xlane.xlu0 %1916
    %v1918 = vrcp.pop %v1917
    %v1919 = vmul.f32 %v1914, %v1918
    %1920 = vrot.lane.b32.xlu0 %v141, 40
    %v1921 = vpop.permute.xlu0 %1920
    %v1924 = vsel %vm148, %v1919, 0
    %1926 = vmatprep.subr.mxu0 0.0
    %1927 = vmatpush1.msra.mxu0 %v1921
    %1928 = vmatprep.subr.mxu0 0.0
    %1929 = vmatpush1.msra.mxu0 0.0
    %1930 = vmatprep.subr.mxu0 0.0
    %1931 = vmatpush1.msra.mxu0 0.0
    %1932 = vmatprep.subr.mxu0 0.0
    %1933 = vmatpush1.msra.mxu0 0.0
    %1934 = vmatprep.subr.mxu0 0.0
    %1935 = vmatpush1.msra.mxu0 0.0
    %1936 = vmatprep.subr.mxu0 0.0
    %1937 = vmatpush1.msra.mxu0 0.0
    %1938 = vmatprep.subr.mxu0 0.0
    %1939 = vmatpush1.msra.mxu0 0.0
    %1940 = vmatprep.subr.mxu0 0.0
    %1941 = vmatpush1.msra.mxu0 0.0
    %1942 = vmatprep.subr.mxu0 0.0
    %1943 = vmatpush1.msra.mxu0 0.0
    %1944 = vmatprep.subr.mxu0 0.0
    %1945 = vmatpush1.msra.mxu0 0.0
    %1946 = vmatprep.subr.mxu0 0.0
    %1947 = vmatpush1.msra.mxu0 0.0
    %1948 = vmatprep.subr.mxu0 0.0
    %1949 = vmatpush1.msra.mxu0 0.0
    %1950 = vmatprep.subr.mxu0 0.0
    %1951 = vmatpush1.msra.mxu0 0.0
    %1952 = vmatprep.subr.mxu0 0.0
    %1953 = vmatpush1.msra.mxu0 0.0
    %1954 = vmatprep.subr.mxu0 0.0
    %1955 = vmatpush1.msra.mxu0 0.0
    %1956 = vmatprep.subr.mxu0 0.0
    %1957 = vmatpush1.msra.mxu0 0.0
    %1958 = vmatprep.subr.mxu0 0.0
    %1959 = vmatpush1.msra.mxu0 0.0
    %1960 = vmatprep.subr.mxu0 0.0
    %1961 = vmatpush1.msra.mxu0 0.0
    %1962 = vmatprep.subr.mxu0 0.0
    %1963 = vmatpush1.msra.mxu0 0.0
    %1964 = vmatprep.subr.mxu0 0.0
    %1965 = vmatpush1.msra.mxu0 0.0
    %1966 = vmatprep.subr.mxu0 0.0
    %1967 = vmatpush1.msra.mxu0 0.0
    %1968 = vmatprep.subr.mxu0 0.0
    %1969 = vmatpush1.msra.mxu0 0.0
    %1970 = vmatprep.subr.mxu0 0.0
    %1971 = vmatpush1.msra.mxu0 0.0
    %1972 = vmatprep.subr.mxu0 0.0
    %1973 = vmatpush1.msra.mxu0 0.0
    %1974 = vmatprep.subr.mxu0 0.0
    %1975 = vmatpush1.msra.mxu0 0.0
    %1976 = vmatprep.subr.mxu0 0.0
    %1977 = vmatpush1.msra.mxu0 0.0
    %1978 = vmatprep.subr.mxu0 0.0
    %1979 = vmatpush1.msra.mxu0 0.0
    %1980 = vmatprep.subr.mxu0 0.0
    %1981 = vmatpush1.msra.mxu0 0.0
    %1982 = vmatprep.subr.mxu0 0.0
    %1983 = vmatpush1.msra.mxu0 0.0
    %1984 = vmatprep.subr.mxu0 0.0
    %1985 = vmatpush1.msra.mxu0 0.0
    %1986 = vmatprep.subr.mxu0 0.0
    %1987 = vmatpush1.msra.mxu0 0.0
    %1988 = vmatprep.subr.mxu0 0.0
    %1989 = vmatpush1.msra.mxu0 0.0
    %1990 = vmatprep.mubr.f32.mxu0 0.0
    %1991 = vmatmul.mubr.f32.gmra.mrb[0].mxu0 %v1924
    %v1992 = vpop.f32.mrb[0].mxu0
    %v1993 = vadd.f32 0.0, %v1992
    %v1994 = vpop.f32.mrb[0].mxu0
    %1995 = vdwg.mxu0
    %v1996 = vld [vmem:[%s1030] sm:$0xff]
    %v1998 = vsel %vm148, %v1993, 0
    %2000 = vmatprep.subr.mxu0 0.0
    %2001 = vmatpush1.msra.mxu0 %v1996
    %2002 = vmatprep.subr.mxu0 0.0
    %2003 = vmatpush1.msra.mxu0 0.0
    %2004 = vmatprep.subr.mxu0 0.0
    %2005 = vmatpush1.msra.mxu0 0.0
    %2006 = vmatprep.subr.mxu0 0.0
    %2007 = vmatpush1.msra.mxu0 0.0
    %2008 = vmatprep.subr.mxu0 0.0
    %2009 = vmatpush1.msra.mxu0 0.0
    %2010 = vmatprep.subr.mxu0 0.0
    %2011 = vmatpush1.msra.mxu0 0.0
    %2012 = vmatprep.subr.mxu0 0.0
    %2013 = vmatpush1.msra.mxu0 0.0
    %2014 = vmatprep.subr.mxu0 0.0
    %2015 = vmatpush1.msra.mxu0 0.0
    %2016 = vmatprep.subr.mxu0 0.0
    %2017 = vmatpush1.msra.mxu0 0.0
    %2018 = vmatprep.subr.mxu0 0.0
    %2019 = vmatpush1.msra.mxu0 0.0
    %2020 = vmatprep.subr.mxu0 0.0
    %2021 = vmatpush1.msra.mxu0 0.0
    %2022 = vmatprep.subr.mxu0 0.0
    %2023 = vmatpush1.msra.mxu0 0.0
    %2024 = vmatprep.subr.mxu0 0.0
    %2025 = vmatpush1.msra.mxu0 0.0
    %2026 = vmatprep.subr.mxu0 0.0
    %2027 = vmatpush1.msra.mxu0 0.0
    %2028 = vmatprep.subr.mxu0 0.0
    %2029 = vmatpush1.msra.mxu0 0.0
    %2030 = vmatprep.subr.mxu0 0.0
    %2031 = vmatpush1.msra.mxu0 0.0
    %2032 = vmatprep.subr.mxu0 0.0
    %2033 = vmatpush1.msra.mxu0 0.0
    %2034 = vmatprep.subr.mxu0 0.0
    %2035 = vmatpush1.msra.mxu0 0.0
    %2036 = vmatprep.subr.mxu0 0.0
    %2037 = vmatpush1.msra.mxu0 0.0
    %2038 = vmatprep.subr.mxu0 0.0
    %2039 = vmatpush1.msra.mxu0 0.0
    %2040 = vmatprep.subr.mxu0 0.0
    %2041 = vmatpush1.msra.mxu0 0.0
    %2042 = vmatprep.subr.mxu0 0.0
    %2043 = vmatpush1.msra.mxu0 0.0
    %2044 = vmatprep.subr.mxu0 0.0
    %2045 = vmatpush1.msra.mxu0 0.0
    %2046 = vmatprep.subr.mxu0 0.0
    %2047 = vmatpush1.msra.mxu0 0.0
    %2048 = vmatprep.subr.mxu0 0.0
    %2049 = vmatpush1.msra.mxu0 0.0
    %2050 = vmatprep.subr.mxu0 0.0
    %2051 = vmatpush1.msra.mxu0 0.0
    %2052 = vmatprep.subr.mxu0 0.0
    %2053 = vmatpush1.msra.mxu0 0.0
    %2054 = vmatprep.subr.mxu0 0.0
    %2055 = vmatpush1.msra.mxu0 0.0
    %2056 = vmatprep.subr.mxu0 0.0
    %2057 = vmatpush1.msra.mxu0 0.0
    %2058 = vmatprep.subr.mxu0 0.0
    %2059 = vmatpush1.msra.mxu0 0.0
    %2060 = vmatprep.subr.mxu0 0.0
    %2061 = vmatpush1.msra.mxu0 0.0
    %2062 = vmatprep.subr.mxu0 0.0
    %2063 = vmatpush1.msra.mxu0 0.0
    %2064 = vmatprep.mubr.f32.mxu0 0.0
    %2065 = vmatmul.mubr.f32.gmra.mrb[0].mxu0 %v1998
    %v2066 = vpop.f32.mrb[0].mxu0
    %v2067 = vadd.f32 0.0, %v2066
    %v2068 = vpop.f32.mrb[0].mxu0
    %2069 = vdwg.mxu0
    %v2070 = vadd.f32 %v1830, %v2067
    %v2071 = vadd.f32 %v2070, %v1110
    %s2072 = scalar_lea.vmem [#allocation7], 8
    %2073 = vst.msk [vmem:[%s2072] sm:$0xff] %vm62, %v2071
    // Predicated region
    $region30: #{mla_forward.1} parent=1 // pred_check
      _
    $region31: #{mla_forward.1} parent=1 // pred_check_branch
      %2075 = sbr.rel (0) target = $region33
    $region32: #{mla_forward.1} parent=1 // pred_region
      %s2077 = ssub.s32 256, 256
      %2078 = vsyncadd [#allocation4], %s2077
      %s2079 = sshll.u32 [#allocation7], 4
      %s2080 = int_to_ptr.vmem [resolvable:$true] %s2079
      %2085 = dma.vmem_to_hbm [thread:$0]  %s2080, 256, %s5, [#allocation4], 128, 128, 8
    $region33: #{mla_forward.1} parent=1 // pred_fallthru
      _
    // Predicated region
    $region34: #{mla_forward.1} parent=1 // pred_check
      _
    $region35: #{mla_forward.1} parent=1 // pred_check_branch
      %2087 = sbr.rel (0) target = $region37
    $region36: #{mla_forward.1} parent=1 // pred_region
      %2088 = dma.done [#allocation4], 256
    $region37: #{mla_forward.1} parent=1 // pred_fallthru
      _
    %2089 = vsyncpa [#allocation3], 1
    %2090 = vsyncpa [#allocation6], 1
    %2091 = vsyncpa [#allocation4], 1

</llo_original>
